<compile_context>
chip_gen: v5e
topology: v5e:2x2
jax: 0.10.0
libtpu: 0.0.40
codegen_flags: <defaults>
</compile_context>

<pallas_src>
import jax
import jax.numpy as jnp
import numpy as np
from jax.experimental import pallas as pl
from jax.experimental.pallas import tpu as pltpu


def _make_kernel(mxu_dtype):
    """Kernel factory; mxu_dtype (None or jnp.bfloat16) selects the in-kernel
    cast of the activation tiles fed to the projection matmuls."""

    def kernel(wq_ref, wk_ref, b_ref, sw_ref, q_ref, k_ref, v_ref,
               ctx_ref, attn_ref):
        bt, s, h = q_ref.shape

        # ---- projections: key@Wk^T + query@Wq^T as two accumulated MXU dots.
        # Activations cast in-kernel (cheap VPU op, no extra HBM pass);
        # accumulation is always f32.
        q = q_ref[...].reshape(bt * s, h)
        k = k_ref[...].reshape(bt * s, h)
        if mxu_dtype is not None:
            q = q.astype(mxu_dtype)
            k = k.astype(mxu_dtype)
        proj = jnp.dot(k, wk_ref[...], preferred_element_type=jnp.float32)
        proj = proj + jnp.dot(q, wq_ref[...], preferred_element_type=jnp.float32)

        # tanh(key_proj + query_proj + bias) in f32 (VPU + EUP).
        t = jnp.tanh(proj + b_ref[...])                              # (bt*s, H)

        # ---- score: VPU multiply + XLU lane reduce (no 1-column MXU matmul).
        # score_proj bias omitted: softmax(x + c) == softmax(x).
        score = jnp.sum(t * sw_ref[...], axis=-1, keepdims=True)    # (bt*s, 1)

        # ---- lane-dense softmax: one cheap XLU transpose of the skinny score
        # column puts S on the lane axis; exp/max/sum/div then run on wide
        # vregs and the attn store needs no trailing transpose.
        score = jnp.swapaxes(score.reshape(bt, s, 1), 1, 2)          # (bt, 1, s)
        m = jnp.max(score, axis=-1, keepdims=True)                   # (bt, 1, 1)
        e = jnp.exp(score - m)
        attn = e / jnp.sum(e, axis=-1, keepdims=True)                # (bt, 1, s)
        attn_ref[...] = attn.astype(attn_ref.dtype)

        # ---- context: batched (1,S)@(S,H) dot on the otherwise-idle MXU,
        # avoiding a (bt,S,H) f32 broadcast temporary.
        ctx = jnp.einsum('bqs,bsh->bqh', attn,
                         v_ref[...].astype(jnp.float32),
                         preferred_element_type=jnp.float32)         # (bt, 1, H)
        ctx_ref[...] = ctx.astype(ctx_ref.dtype)

    return kernel


def _vmem_capacity_bytes():
    """Generation-aware VMEM capacity (falls back to the v7x 64 MiB per-TC)."""
    try:
        return int(pltpu.get_tpu_info().vmem_capacity_bytes)
    except Exception:
        return 64 * 1024 * 1024


def _choose_batch_tile(batch, seq, hidden, itemsize, tile_budget_bytes):
    """Fold batches so the per-step working set approaches the VMEM budget
    (fewer ~0.35us grid steps, near-roofline DMAs), while keeping an even
    grid length >= 2 so the parallel batch axis can shard across TCs."""
    # Double-buffered q/k/v input blocks + ~2 f32 temporaries per row.
    per_batch = seq * hidden * (3 * 2 * itemsize + 2 * 4)
    bt = max(1, min(batch, tile_budget_bytes // max(per_batch, 1)))
    while batch % bt:
        bt -= 1
    if batch // bt < 2 and batch >= 2:
        bt = max(1, batch // 2)
        while batch % bt:
            bt -= 1
    # Prefer an even number of grid steps (v7x 2-TC load balance).
    while bt > 1 and (batch // bt) % 2:
        bt -= 1
        while batch % bt:
            bt -= 1
    return max(bt, 1)


def additive_attention(params, query, key, value, *,
                       batch_tile=None, matmul_dtype=None,
                       single_buffer_consts=True):
    """Pallas forward of AdditiveAttention.

    params:
      wq_t (H,H), wk_t (H,H): transposed nn.Linear weights (so x @ W_t)
      bias (1,H):             additive bias inside the tanh
      sw   (1,H):             score_proj weight row
      sb   (1,1):             score_proj bias (unused: softmax shift-invariant)
    Returns (context (B,1,H), attn (B,S)).
    """
    B, S, H = query.shape
    assert key.shape == (B, S, H) and value.shape == (B, S, H)

    # Generation-aware VMEM budget (v5e/v6e: 128 MiB, v7x: 64 MiB per TC).
    vmem_cap = _vmem_capacity_bytes()
    vmem_limit = max(32 * 1024 * 1024,
                     min(vmem_cap - 16 * 1024 * 1024, 100 * 1024 * 1024))
    tile_budget = int(vmem_limit * 0.6)

    itemsize = np.dtype(query.dtype).itemsize
    bt = (batch_tile if batch_tile is not None
          else _choose_batch_tile(B, S, H, itemsize, tile_budget))
    assert B % bt == 0, "batch_tile must divide the batch size"

    wq = params["wq_t"]
    wk = params["wk_t"]
    if matmul_dtype is not None:          # only the small weights are cast here
        wq = wq.astype(matmul_dtype)
        wk = wk.astype(matmul_dtype)
    bias = params["bias"].reshape(1, H).astype(jnp.float32)
    sw_row = params["sw"].reshape(1, H).astype(jnp.float32)

    def _const_spec(shape):
        # Grid-constant block: single-buffer it (no point double-buffering a
        # block whose index map never changes), freeing VMEM for bigger tiles.
        if single_buffer_consts:
            return pl.BlockSpec(shape, lambda b: (0,) * len(shape),
                                pipeline_mode=pl.Buffered(1))
        return pl.BlockSpec(shape, lambda b: (0,) * len(shape))

    grid_spec = pltpu.PrefetchScalarGridSpec(
        num_scalar_prefetch=0,
        grid=(B // bt,),
        in_specs=[
            _const_spec((H, H)),                                 # Wq^T
            _const_spec((H, H)),                                 # Wk^T
            _const_spec((1, H)),                                 # tanh bias
            _const_spec((1, H)),                                 # score weight row
            pl.BlockSpec((bt, S, H), lambda b: (b, 0, 0)),       # query
            pl.BlockSpec((bt, S, H), lambda b: (b, 0, 0)),       # key
            pl.BlockSpec((bt, S, H), lambda b: (b, 0, 0)),       # value
        ],
        out_specs=[
            pl.BlockSpec((bt, 1, H), lambda b: (b, 0, 0)),       # context
            pl.BlockSpec((bt, 1, S), lambda b: (b, 0, 0)),       # attn (lane-dense)
        ],
    )

    ctx, attn3 = pl.pallas_call(
        _make_kernel(matmul_dtype),
        out_shape=(jax.ShapeDtypeStruct((B, 1, H), query.dtype),
                   jax.ShapeDtypeStruct((B, 1, S), query.dtype)),
        grid_spec=grid_spec,
        compiler_params=pltpu.CompilerParams(
            dimension_semantics=("parallel",),
            vmem_limit_bytes=vmem_limit,
        ),
    )(wq, wk, bias, sw_row, query, key, value)

    return ctx, attn3[:, 0, :]


def reference_forward(params, query, key, value):
    qp = query @ params["wq_t"]
    kp = key @ params["wk_t"]
    t = jnp.tanh(kp + qp + params["bias"].reshape(1, 1, -1))
    score = jnp.sum(t * params["sw"].reshape(1, 1, -1), axis=-1) + params["sb"].reshape(())
    attn = jax.nn.softmax(score, axis=-1)
    context = jnp.sum(attn[..., None] * value, axis=1, keepdims=True)
    return context, attn


if __name__ == "__main__":
    B, S, H = 2, 8, 32
    root = jax.random.PRNGKey(0)
    k_wq, k_wk, k_b, k_sw, k_sb, k_q, k_k, k_v = jax.random.split(root, 8)

    bound = 1.0 / np.sqrt(H)
    params = {
        "wq_t": jax.random.uniform(k_wq, (H, H), jnp.float32, -bound, bound),
        "wk_t": jax.random.uniform(k_wk, (H, H), jnp.float32, -bound, bound),
        "bias": jax.random.uniform(k_b, (1, H), jnp.float32, -0.1, 0.1),
        "sw":   jax.random.uniform(k_sw, (1, H), jnp.float32, -bound, bound),
        "sb":   jax.random.uniform(k_sb, (1, 1), jnp.float32, -bound, bound),
    }

    query = jax.random.normal(k_q, (B, S, H), jnp.float32)
    key_t = jax.random.normal(k_k, (B, S, H), jnp.float32)
    value = jax.random.normal(k_v, (B, S, H), jnp.float32)

    fwd = jax.jit(additive_attention,
                  static_argnames=("batch_tile", "matmul_dtype",
                                   "single_buffer_consts"))

    # Prefer single-buffered grid-constant weights (pl.Buffered(1)); fall back
    # to default double-buffering if this JAX build rejects pipeline_mode.
    single_buf = True
    try:
        context, attn = fwd(params, query, key_t, value, single_buffer_consts=True)
        jax.block_until_ready((context, attn))
    except Exception:
        single_buf = False
        context, attn = fwd(params, query, key_t, value, single_buffer_consts=False)
        jax.block_until_ready((context, attn))

    ctx_exp, attn_exp = reference_forward(params, query, key_t, value)
    np.testing.assert_allclose(np.asarray(context), np.asarray(ctx_exp),
                               rtol=1e-4, atol=1e-5)
    np.testing.assert_allclose(np.asarray(attn), np.asarray(attn_exp),
                               rtol=1e-4, atol=1e-5)

    # bf16-fed MXU path (v6e/v7x recommendation): in-kernel activation cast,
    # tanh/softmax/context stay f32.  On v5e (mem-bound) just use the default.
    ctx_bf, attn_bf = fwd(params, query, key_t, value,
                          matmul_dtype=jnp.bfloat16,
                          single_buffer_consts=single_buf)
    jax.block_until_ready((ctx_bf, attn_bf))
    np.testing.assert_allclose(np.asarray(ctx_bf), np.asarray(ctx_exp), rtol=0, atol=5e-2)
    np.testing.assert_allclose(np.asarray(attn_bf), np.asarray(attn_exp), rtol=0, atol=5e-2)

    print("KERNEL_OK")
</pallas_src>

<mosaic_0001>
module attributes {stable_mosaic.version = 11 : i64} {
  func.func @kernel(%arg0: i32, %arg1: memref<32x32xf32, #tpu.memory_space<vmem>>, %arg2: memref<32x32xf32, #tpu.memory_space<vmem>>, %arg3: memref<1x32xf32, #tpu.memory_space<vmem>>, %arg4: memref<1x32xf32, #tpu.memory_space<vmem>>, %arg5: memref<1x8x32xf32, #tpu.memory_space<vmem>>, %arg6: memref<1x8x32xf32, #tpu.memory_space<vmem>>, %arg7: memref<1x8x32xf32, #tpu.memory_space<vmem>>, %arg8: memref<1x1x32xf32, #tpu.memory_space<vmem>>, %arg9: memref<1x1x8xf32, #tpu.memory_space<vmem>>) attributes {dimension_semantics = [#tpu.dimension_semantics<parallel>], iteration_bounds = array<i64: 2>, scalar_prefetch = 0 : i64, scratch_operands = 0 : i64, tpu.core_type = #tpu.core_type<tc>, window_params = [{pipeline_mode = #tpu.pipeline_mode<synchronous>, transform_indices = @transform_0, window_bounds = array<i64: 32, 32>}, {pipeline_mode = #tpu.pipeline_mode<synchronous>, transform_indices = @transform_1, window_bounds = array<i64: 32, 32>}, {pipeline_mode = #tpu.pipeline_mode<synchronous>, transform_indices = @transform_2, window_bounds = array<i64: 1, 32>}, {pipeline_mode = #tpu.pipeline_mode<synchronous>, transform_indices = @transform_3, window_bounds = array<i64: 1, 32>}, {transform_indices = @transform_4, window_bounds = array<i64: 1, 8, 32>}, {transform_indices = @transform_5, window_bounds = array<i64: 1, 8, 32>}, {transform_indices = @transform_6, window_bounds = array<i64: 1, 8, 32>}, {transform_indices = @transform_7, window_bounds = array<i64: 1, 1, 32>}, {transform_indices = @transform_8, window_bounds = array<i64: 1, 1, 8>}]} {
    %c0 = arith.constant 0 : index
    %c0_0 = arith.constant 0 : index
    %c0_1 = arith.constant 0 : index
    %0 = vector.load %arg5[%c0, %c0_0, %c0_1] : memref<1x8x32xf32, #tpu.memory_space<vmem>>, vector<1x8x32xf32>
    %1 = vector.shape_cast %0 : vector<1x8x32xf32> to vector<8x32xf32>
    %c0_2 = arith.constant 0 : index
    %c0_3 = arith.constant 0 : index
    %c0_4 = arith.constant 0 : index
    %2 = vector.load %arg6[%c0_2, %c0_3, %c0_4] : memref<1x8x32xf32, #tpu.memory_space<vmem>>, vector<1x8x32xf32>
    %3 = vector.shape_cast %2 : vector<1x8x32xf32> to vector<8x32xf32>
    %c0_5 = arith.constant 0 : index
    %c0_6 = arith.constant 0 : index
    %4 = vector.load %arg2[%c0_5, %c0_6] : memref<32x32xf32, #tpu.memory_space<vmem>>, vector<32x32xf32>
    %cst = arith.constant dense<0.000000e+00> : vector<8x32xf32>
    %5 = tpu.matmul %3, %4, %cst {dimension_numbers = #tpu.dot_dimension_numbers<[1], [0], [0], [1], [0, 0, 1, 1], [], []>} : vector<8x32xf32>, vector<32x32xf32>, vector<8x32xf32> -> vector<8x32xf32>
    %c0_7 = arith.constant 0 : index
    %c0_8 = arith.constant 0 : index
    %6 = vector.load %arg1[%c0_7, %c0_8] : memref<32x32xf32, #tpu.memory_space<vmem>>, vector<32x32xf32>
    %cst_9 = arith.constant dense<0.000000e+00> : vector<8x32xf32>
    %7 = tpu.matmul %1, %6, %cst_9 {dimension_numbers = #tpu.dot_dimension_numbers<[1], [0], [0], [1], [0, 0, 1, 1], [], []>} : vector<8x32xf32>, vector<32x32xf32>, vector<8x32xf32> -> vector<8x32xf32>
    %8 = arith.addf %5, %7 : vector<8x32xf32>
    %c0_10 = arith.constant 0 : index
    %c0_11 = arith.constant 0 : index
    %9 = vector.load %arg3[%c0_10, %c0_11] : memref<1x32xf32, #tpu.memory_space<vmem>>, vector<1x32xf32>
    %10 = vector.broadcast %9 : vector<1x32xf32> to vector<8x32xf32>
    %11 = arith.addf %8, %10 : vector<8x32xf32>
    %12 = math.tanh %11 : vector<8x32xf32>
    %c0_12 = arith.constant 0 : index
    %c0_13 = arith.constant 0 : index
    %13 = vector.load %arg4[%c0_12, %c0_13] : memref<1x32xf32, #tpu.memory_space<vmem>>, vector<1x32xf32>
    %14 = vector.broadcast %13 : vector<1x32xf32> to vector<8x32xf32>
    %15 = arith.mulf %12, %14 : vector<8x32xf32>
    %cst_14 = arith.constant dense<0.000000e+00> : vector<8xf32>
    %16 = vector.multi_reduction <add>, %15, %cst_14 [1] : vector<8x32xf32> to vector<8xf32>
    %17 = vector.shape_cast %16 : vector<8xf32> to vector<8x1xf32>
    %18 = vector.shape_cast %17 : vector<8x1xf32> to vector<1x8x1xf32>
    %19 = tpu.transpose %18, [0, 2, 1] : vector<1x8x1xf32> -> vector<1x1x8xf32>
    %cst_15 = arith.constant dense<0xFF800000> : vector<1x1xf32>
    %20 = vector.multi_reduction <maximumf>, %19, %cst_15 [2] : vector<1x1x8xf32> to vector<1x1xf32>
    %21 = vector.shape_cast %20 : vector<1x1xf32> to vector<1x1x1xf32>
    %22 = vector.broadcast %21 : vector<1x1x1xf32> to vector<1x1x8xf32>
    %23 = arith.subf %19, %22 : vector<1x1x8xf32>
    %24 = math.exp %23 : vector<1x1x8xf32>
    %cst_16 = arith.constant dense<0.000000e+00> : vector<1x1xf32>
    %25 = vector.multi_reduction <add>, %24, %cst_16 [2] : vector<1x1x8xf32> to vector<1x1xf32>
    %26 = vector.shape_cast %25 : vector<1x1xf32> to vector<1x1x1xf32>
    %27 = vector.broadcast %26 : vector<1x1x1xf32> to vector<1x1x8xf32>
    %28 = arith.divf %24, %27 : vector<1x1x8xf32>
    %c0_17 = arith.constant 0 : index
    %c0_18 = arith.constant 0 : index
    %c0_19 = arith.constant 0 : index
    %29 = vector.load %arg9[%c0_17, %c0_18, %c0_19] : memref<1x1x8xf32, #tpu.memory_space<vmem>>, vector<1x1x8xf32>
    tpu.vector_store %arg9[%c0_17, %c0_18, %c0_19], %28 {strides = array<i32>} : memref<1x1x8xf32, #tpu.memory_space<vmem>>, vector<1x1x8xf32>,
    %c0_20 = arith.constant 0 : index
    %c0_21 = arith.constant 0 : index
    %c0_22 = arith.constant 0 : index
    %30 = vector.load %arg7[%c0_20, %c0_21, %c0_22] : memref<1x8x32xf32, #tpu.memory_space<vmem>>, vector<1x8x32xf32>
    "tpu.trace_start"() <{level = 10 : i32, message = "bqs,bsh->bqh"}> : () -> ()
    %cst_23 = arith.constant dense<0.000000e+00> : vector<1x1x32xf32>
    %31 = tpu.matmul %28, %30, %cst_23 {dimension_numbers = #tpu.dot_dimension_numbers<[2], [1], [1], [2], [0, 0, 0, 1, 1, 2], [0], [0]>} : vector<1x1x8xf32>, vector<1x8x32xf32>, vector<1x1x32xf32> -> vector<1x1x32xf32>
    "tpu.trace_stop"() : () -> ()
    %c0_24 = arith.constant 0 : index
    %c0_25 = arith.constant 0 : index
    %c0_26 = arith.constant 0 : index
    %32 = vector.load %arg8[%c0_24, %c0_25, %c0_26] : memref<1x1x32xf32, #tpu.memory_space<vmem>>, vector<1x1x32xf32>
    tpu.vector_store %arg8[%c0_24, %c0_25, %c0_26], %31 {strides = array<i32>} : memref<1x1x32xf32, #tpu.memory_space<vmem>>, vector<1x1x32xf32>,
    return
  }
  func.func @transform_0(%arg0: i32) -> (i32, i32) {
    %c0_i32 = arith.constant 0 : i32
    %c0_i32_0 = arith.constant 0 : i32
    %c0_i32_1 = arith.constant 0 : i32
    return %c0_i32, %c0_i32_0 : i32, i32
  }
  func.func @transform_1(%arg0: i32) -> (i32, i32) {
    %c0_i32 = arith.constant 0 : i32
    %c0_i32_0 = arith.constant 0 : i32
    %c0_i32_1 = arith.constant 0 : i32
    return %c0_i32, %c0_i32_0 : i32, i32
  }
  func.func @transform_2(%arg0: i32) -> (i32, i32) {
    %c0_i32 = arith.constant 0 : i32
    %c0_i32_0 = arith.constant 0 : i32
    %c0_i32_1 = arith.constant 0 : i32
    return %c0_i32, %c0_i32_0 : i32, i32
  }
  func.func @transform_3(%arg0: i32) -> (i32, i32) {
    %c0_i32 = arith.constant 0 : i32
    %c0_i32_0 = arith.constant 0 : i32
    %c0_i32_1 = arith.constant 0 : i32
    return %c0_i32, %c0_i32_0 : i32, i32
  }
  func.func @transform_4(%arg0: i32) -> (i32, i32, i32) {
    %c0_i32 = arith.constant 0 : i32
    %c0_i32_0 = arith.constant 0 : i32
    %c0_i32_1 = arith.constant 0 : i32
    return %arg0, %c0_i32, %c0_i32_0 : i32, i32, i32
  }
  func.func @transform_5(%arg0: i32) -> (i32, i32, i32) {
    %c0_i32 = arith.constant 0 : i32
    %c0_i32_0 = arith.constant 0 : i32
    %c0_i32_1 = arith.constant 0 : i32
    return %arg0, %c0_i32, %c0_i32_0 : i32, i32, i32
  }
  func.func @transform_6(%arg0: i32) -> (i32, i32, i32) {
    %c0_i32 = arith.constant 0 : i32
    %c0_i32_0 = arith.constant 0 : i32
    %c0_i32_1 = arith.constant 0 : i32
    return %arg0, %c0_i32, %c0_i32_0 : i32, i32, i32
  }
  func.func @transform_7(%arg0: i32) -> (i32, i32, i32) {
    %c0_i32 = arith.constant 0 : i32
    %c0_i32_0 = arith.constant 0 : i32
    %c0_i32_1 = arith.constant 0 : i32
    return %arg0, %c0_i32, %c0_i32_0 : i32, i32, i32
  }
  func.func @transform_8(%arg0: i32) -> (i32, i32, i32) {
    %c0_i32 = arith.constant 0 : i32
    %c0_i32_0 = arith.constant 0 : i32
    %c0_i32_1 = arith.constant 0 : i32
    return %arg0, %c0_i32, %c0_i32_0 : i32, i32, i32
  }
}

module attributes {stable_mosaic.version = 11 : i64} {
  func.func @kernel(%arg0: i32, %arg1: memref<32x32xf32, #tpu.memory_space<vmem>>, %arg2: memref<32x32xf32, #tpu.memory_space<vmem>>, %arg3: memref<1x32xf32, #tpu.memory_space<vmem>>, %arg4: memref<1x32xf32, #tpu.memory_space<vmem>>, %arg5: memref<1x8x32xf32, #tpu.memory_space<vmem>>, %arg6: memref<1x8x32xf32, #tpu.memory_space<vmem>>, %arg7: memref<1x8x32xf32, #tpu.memory_space<vmem>>, %arg8: memref<1x1x32xf32, #tpu.memory_space<vmem>>, %arg9: memref<1x1x8xf32, #tpu.memory_space<vmem>>) attributes {dimension_semantics = [#tpu.dimension_semantics<parallel>], iteration_bounds = array<i64: 2>, scalar_prefetch = 0 : i64, scratch_operands = 0 : i64, tpu.core_type = #tpu.core_type<tc>, window_params = [{pipeline_mode = #tpu.pipeline_mode<synchronous>, transform_indices = @transform_0, window_bounds = array<i64: 32, 32>}, {pipeline_mode = #tpu.pipeline_mode<synchronous>, transform_indices = @transform_1, window_bounds = array<i64: 32, 32>}, {pipeline_mode = #tpu.pipeline_mode<synchronous>, transform_indices = @transform_2, window_bounds = array<i64: 1, 32>}, {pipeline_mode = #tpu.pipeline_mode<synchronous>, transform_indices = @transform_3, window_bounds = array<i64: 1, 32>}, {transform_indices = @transform_4, window_bounds = array<i64: 1, 8, 32>}, {transform_indices = @transform_5, window_bounds = array<i64: 1, 8, 32>}, {transform_indices = @transform_6, window_bounds = array<i64: 1, 8, 32>}, {transform_indices = @transform_7, window_bounds = array<i64: 1, 1, 32>}, {transform_indices = @transform_8, window_bounds = array<i64: 1, 1, 8>}]} {
    %c0 = arith.constant 0 : index
    %c0_0 = arith.constant 0 : index
    %c0_1 = arith.constant 0 : index
    %0 = vector.load %arg5[%c0, %c0_0, %c0_1] : memref<1x8x32xf32, #tpu.memory_space<vmem>>, vector<1x8x32xf32>
    %1 = vector.shape_cast %0 : vector<1x8x32xf32> to vector<8x32xf32>
    %c0_2 = arith.constant 0 : index
    %c0_3 = arith.constant 0 : index
    %c0_4 = arith.constant 0 : index
    %2 = vector.load %arg6[%c0_2, %c0_3, %c0_4] : memref<1x8x32xf32, #tpu.memory_space<vmem>>, vector<1x8x32xf32>
    %3 = vector.shape_cast %2 : vector<1x8x32xf32> to vector<8x32xf32>
    %c0_5 = arith.constant 0 : index
    %c0_6 = arith.constant 0 : index
    %4 = vector.load %arg2[%c0_5, %c0_6] : memref<32x32xf32, #tpu.memory_space<vmem>>, vector<32x32xf32>
    %cst = arith.constant dense<0.000000e+00> : vector<8x32xf32>
    %5 = tpu.matmul %3, %4, %cst {dimension_numbers = #tpu.dot_dimension_numbers<[1], [0], [0], [1], [0, 0, 1, 1], [], []>} : vector<8x32xf32>, vector<32x32xf32>, vector<8x32xf32> -> vector<8x32xf32>
    %c0_7 = arith.constant 0 : index
    %c0_8 = arith.constant 0 : index
    %6 = vector.load %arg1[%c0_7, %c0_8] : memref<32x32xf32, #tpu.memory_space<vmem>>, vector<32x32xf32>
    %cst_9 = arith.constant dense<0.000000e+00> : vector<8x32xf32>
    %7 = tpu.matmul %1, %6, %cst_9 {dimension_numbers = #tpu.dot_dimension_numbers<[1], [0], [0], [1], [0, 0, 1, 1], [], []>} : vector<8x32xf32>, vector<32x32xf32>, vector<8x32xf32> -> vector<8x32xf32>
    %8 = arith.addf %5, %7 : vector<8x32xf32>
    %c0_10 = arith.constant 0 : index
    %c0_11 = arith.constant 0 : index
    %9 = vector.load %arg3[%c0_10, %c0_11] : memref<1x32xf32, #tpu.memory_space<vmem>>, vector<1x32xf32>
    %10 = vector.broadcast %9 : vector<1x32xf32> to vector<8x32xf32>
    %11 = arith.addf %8, %10 : vector<8x32xf32>
    %12 = math.tanh %11 : vector<8x32xf32>
    %c0_12 = arith.constant 0 : index
    %c0_13 = arith.constant 0 : index
    %13 = vector.load %arg4[%c0_12, %c0_13] : memref<1x32xf32, #tpu.memory_space<vmem>>, vector<1x32xf32>
    %14 = vector.broadcast %13 : vector<1x32xf32> to vector<8x32xf32>
    %15 = arith.mulf %12, %14 : vector<8x32xf32>
    %cst_14 = arith.constant dense<0.000000e+00> : vector<8xf32>
    %16 = vector.multi_reduction <add>, %15, %cst_14 [1] : vector<8x32xf32> to vector<8xf32>
    %17 = vector.shape_cast %16 : vector<8xf32> to vector<8x1xf32>
    %18 = vector.shape_cast %17 : vector<8x1xf32> to vector<1x8x1xf32>
    %19 = tpu.transpose %18, [0, 2, 1] : vector<1x8x1xf32> -> vector<1x1x8xf32>
    %cst_15 = arith.constant dense<0xFF800000> : vector<1x1xf32>
    %20 = vector.multi_reduction <maximumf>, %19, %cst_15 [2] : vector<1x1x8xf32> to vector<1x1xf32>
    %21 = vector.shape_cast %20 : vector<1x1xf32> to vector<1x1x1xf32>
    %22 = vector.broadcast %21 : vector<1x1x1xf32> to vector<1x1x8xf32>
    %23 = arith.subf %19, %22 : vector<1x1x8xf32>
    %24 = math.exp %23 : vector<1x1x8xf32>
    %cst_16 = arith.constant dense<0.000000e+00> : vector<1x1xf32>
    %25 = vector.multi_reduction <add>, %24, %cst_16 [2] : vector<1x1x8xf32> to vector<1x1xf32>
    %26 = vector.shape_cast %25 : vector<1x1xf32> to vector<1x1x1xf32>
    %27 = vector.broadcast %26 : vector<1x1x1xf32> to vector<1x1x8xf32>
    %28 = arith.divf %24, %27 : vector<1x1x8xf32>
    %c0_17 = arith.constant 0 : index
    %c0_18 = arith.constant 0 : index
    %c0_19 = arith.constant 0 : index
    %29 = vector.load %arg9[%c0_17, %c0_18, %c0_19] : memref<1x1x8xf32, #tpu.memory_space<vmem>>, vector<1x1x8xf32>
    tpu.vector_store %arg9[%c0_17, %c0_18, %c0_19], %28 {strides = array<i32>} : memref<1x1x8xf32, #tpu.memory_space<vmem>>, vector<1x1x8xf32>,
    %c0_20 = arith.constant 0 : index
    %c0_21 = arith.constant 0 : index
    %c0_22 = arith.constant 0 : index
    %30 = vector.load %arg7[%c0_20, %c0_21, %c0_22] : memref<1x8x32xf32, #tpu.memory_space<vmem>>, vector<1x8x32xf32>
    "tpu.trace_start"() <{level = 10 : i32, message = "bqs,bsh->bqh"}> : () -> ()
    %cst_23 = arith.constant dense<0.000000e+00> : vector<1x1x32xf32>
    %31 = tpu.matmul %28, %30, %cst_23 {dimension_numbers = #tpu.dot_dimension_numbers<[2], [1], [1], [2], [0, 0, 0, 1, 1, 2], [0], [0]>} : vector<1x1x8xf32>, vector<1x8x32xf32>, vector<1x1x32xf32> -> vector<1x1x32xf32>
    "tpu.trace_stop"() : () -> ()
    %c0_24 = arith.constant 0 : index
    %c0_25 = arith.constant 0 : index
    %c0_26 = arith.constant 0 : index
    %32 = vector.load %arg8[%c0_24, %c0_25, %c0_26] : memref<1x1x32xf32, #tpu.memory_space<vmem>>, vector<1x1x32xf32>
    tpu.vector_store %arg8[%c0_24, %c0_25, %c0_26], %31 {strides = array<i32>} : memref<1x1x32xf32, #tpu.memory_space<vmem>>, vector<1x1x32xf32>,
    return
  }
  func.func @transform_0(%arg0: i32) -> (i32, i32) {
    %c0_i32 = arith.constant 0 : i32
    %c0_i32_0 = arith.constant 0 : i32
    %c0_i32_1 = arith.constant 0 : i32
    return %c0_i32, %c0_i32_0 : i32, i32
  }
  func.func @transform_1(%arg0: i32) -> (i32, i32) {
    %c0_i32 = arith.constant 0 : i32
    %c0_i32_0 = arith.constant 0 : i32
    %c0_i32_1 = arith.constant 0 : i32
    return %c0_i32, %c0_i32_0 : i32, i32
  }
  func.func @transform_2(%arg0: i32) -> (i32, i32) {
    %c0_i32 = arith.constant 0 : i32
    %c0_i32_0 = arith.constant 0 : i32
    %c0_i32_1 = arith.constant 0 : i32
    return %c0_i32, %c0_i32_0 : i32, i32
  }
  func.func @transform_3(%arg0: i32) -> (i32, i32) {
    %c0_i32 = arith.constant 0 : i32
    %c0_i32_0 = arith.constant 0 : i32
    %c0_i32_1 = arith.constant 0 : i32
    return %c0_i32, %c0_i32_0 : i32, i32
  }
  func.func @transform_4(%arg0: i32) -> (i32, i32, i32) {
    %c0_i32 = arith.constant 0 : i32
    %c0_i32_0 = arith.constant 0 : i32
    %c0_i32_1 = arith.constant 0 : i32
    return %arg0, %c0_i32, %c0_i32_0 : i32, i32, i32
  }
  func.func @transform_5(%arg0: i32) -> (i32, i32, i32) {
    %c0_i32 = arith.constant 0 : i32
    %c0_i32_0 = arith.constant 0 : i32
    %c0_i32_1 = arith.constant 0 : i32
    return %arg0, %c0_i32, %c0_i32_0 : i32, i32, i32
  }
  func.func @transform_6(%arg0: i32) -> (i32, i32, i32) {
    %c0_i32 = arith.constant 0 : i32
    %c0_i32_0 = arith.constant 0 : i32
    %c0_i32_1 = arith.constant 0 : i32
    return %arg0, %c0_i32, %c0_i32_0 : i32, i32, i32
  }
  func.func @transform_7(%arg0: i32) -> (i32, i32, i32) {
    %c0_i32 = arith.constant 0 : i32
    %c0_i32_0 = arith.constant 0 : i32
    %c0_i32_1 = arith.constant 0 : i32
    return %arg0, %c0_i32, %c0_i32_0 : i32, i32, i32
  }
  func.func @transform_8(%arg0: i32) -> (i32, i32, i32) {
    %c0_i32 = arith.constant 0 : i32
    %c0_i32_0 = arith.constant 0 : i32
    %c0_i32_1 = arith.constant 0 : i32
    return %arg0, %c0_i32, %c0_i32_0 : i32, i32, i32
  }
}

</mosaic_0001>

<llo_original>
// kernel: additive_attention.1
$region0: #{additive_attention.1}
  #allocation0 [shape = 'u32[]', space=smem, size = 0x4, offset = 0x4, fixed_abs, tag = 'smem constant byte address 0x4 - core index']
  #allocation1 [shape = 'u32[72,128]{1,0:T(1,128)}', space=vmem, size = 0x9000, scoped, tag = 'internal scratch']
  %s0 = inlined_call_operand.hbm [shape: f32[32,32], index: 0, kind: input, shape index: {}]
  %s1 = inlined_call_operand.hbm [shape: f32[32,32], index: 1, kind: input, shape index: {}]
  %s2 = inlined_call_operand.hbm [shape: f32[1,32], index: 2, kind: input, shape index: {}]
  %s3 = inlined_call_operand.hbm [shape: f32[1,32], index: 3, kind: input, shape index: {}]
  %s4 = inlined_call_operand.hbm [shape: f32[2,8,32], index: 4, kind: input, shape index: {}]
  %s5 = inlined_call_operand.hbm [shape: f32[2,8,32], index: 5, kind: input, shape index: {}]
  %s6 = inlined_call_operand.hbm [shape: f32[2,8,32], index: 6, kind: input, shape index: {}]
  %s7 = inlined_call_operand.hbm [shape: f32[2,1,32], index: 7, kind: output, shape index: {0}]
  %s8 = inlined_call_operand.hbm [shape: f32[2,1,8], index: 8, kind: output, shape index: {1}]
  %9 = xla_tuple %s7, %s8
  %s10 = sld [smem:[#allocation0]]
  $region97: #{additive_attention.1} parent=0
    _
  %s12 = ssub.s32 1, %s10
  %s13 = scalar_select 0, %s12, %s10
  $region1: #{additive_attention.1} parent=0
    #allocation2 [shape = 'u8[16384]{0}', space=vmem, size = 0x4000, scoped, tag = 'input window, operand 0, single buffered']
    #allocation3 [shape = 's32[2]{0}', space=sflag, size = 0x8, scoped, tag = 'scoped memory for additive_attention.1']
    #allocation4 [shape = 's32[2]{0}', space=sflag, size = 0x8, scoped, tag = 'scoped memory for additive_attention.1']
    #allocation5 [shape = 'u8[16384]{0}', space=vmem, size = 0x4000, scoped, tag = 'input window, operand 1, single buffered']
    #allocation6 [shape = 's32[1]{0}', space=sflag, size = 0x4, scoped, tag = 'scoped memory for additive_attention.1']
    #allocation7 [shape = 'u8[512]{0}', space=vmem, size = 0x400, scoped, tag = 'input window, operand 2, single buffered']
    #allocation8 [shape = 'u8[512]{0}', space=vmem, size = 0x400, scoped, tag = 'input window, operand 3, single buffered']
    #allocation9 [shape = 's32[1]{0}', space=sflag, size = 0x4, scoped, tag = 'scoped memory for additive_attention.1']
    #allocation10 [shape = 'u8[8192]{0}', space=vmem, size = 0x2000, scoped, tag = 'input window, operand 4']
    #allocation11 [shape = 'u8[8192]{0}', space=vmem, size = 0x2000, scoped, tag = 'input window, operand 5']
    #allocation12 [shape = 'u8[8192]{0}', space=vmem, size = 0x2000, scoped, tag = 'input window, operand 6']
    #allocation13 [shape = 'u8[1024]{0}', space=vmem, size = 0x400, scoped, tag = 'output window, operand 0']
    #allocation14 [shape = 'u8[1024]{0}', space=vmem, size = 0x400, scoped, tag = 'output window, operand 1']
    #allocation15 [shape = 's32[2]{0}', space=sflag, size = 0x8, scoped, tag = 'scoped memory for additive_attention.1']
    %14 = vsyncpa [#allocation3], 0
    %15 = vsyncpa [#allocation6], 0
    %16 = vsyncpa [#allocation9], 0
    %17 = vsyncpa [#allocation4], 0
    %s18 = scalar_lea.sflag [#allocation4], 1
    %19 = vsyncpa %s18, 0
    %20 = vsyncpa [#allocation15], 0
    %s21 = scalar_lea.sflag [#allocation15], 1
    %22 = vsyncpa %s21, 0
    loop: start=0, step=1, limit=4
    $region2: #{additive_attention.1} parent=1 // loop_pre_header
      _
    $region3: #{additive_attention.1} parent=1 // loop_header
      %s24 = sphi 0, %s28
      %p25 = scmp.ge.s32.totalorder %s24, 4
      %s32 = sphi 0, %s32
      %s34 = sphi 0, %s32
      %s35 = sphi 0, %s34
      %s49 = sphi 0, %s35
      %s53 = sphi 0, %s53
      %s55 = sphi 0, %s53
      %s56 = sphi 0, %s55
      %s70 = sphi 0, %s56
      %s74 = sphi 0, %s74
      %s76 = sphi 0, %s74
      %s77 = sphi 0, %s76
      %s91 = sphi 0, %s77
      %s95 = sphi 0, %s95
      %s97 = sphi 0, %s95
      %s98 = sphi 0, %s97
      %s112 = sphi 0, %s98
      %s118 = sphi 0, %s120
      %s121 = sphi 0, %s118
      %s122 = sphi 0, %s121
      %s138 = sphi 0, %s122
      %s144 = sphi 0, %s146
      %s147 = sphi 0, %s144
      %s148 = sphi 0, %s147
      %s164 = sphi 0, %s148
      %s170 = sphi 0, %s172
      %s173 = sphi 0, %s170
      %s174 = sphi 0, %s173
      %s190 = sphi 0, %s174
      %s196 = sphi 0, %s198
      %s199 = sphi 0, %s196
      %s200 = sphi 0, %s199
      %s216 = sphi 0, %s200
      %s222 = sphi 0, %s224
      %s225 = sphi 0, %s222
      %s226 = sphi 0, %s225
      %s242 = sphi 0, %s226
    $region4: #{additive_attention.1} parent=1 // loop_header_branch
      %27 = sbr.rel (%p25) target = $region8
    $region5: #{additive_attention.1} parent=1 // loop_body
      %s29 = ssub.s32 %s24, 1
      %s30 = ssub.s32 %s24, 2
      %s31 = sadd.s32 %s24, 1
      %s33 = sadd.s32 %s32, 1
      %p36 = scmp.eq.s32.totalorder %s24, 1
      %p37 = scmp.ne.s32.totalorder %s32, %s34
      %p38 = scmp.eq.s32.totalorder %s24, 0
      %p39 = por %p37, %p38
      %p40 = scmp.ne.s32.totalorder %s32, %s34
      %p41 = scmp.eq.s32.totalorder %s29, 1
      %p42 = por %p40, %p41
      %p43 = scmp.ne.s32.totalorder %s34, %s35
      %p44 = scmp.eq.s32.totalorder %s29, 0
      %p45 = por %p43, %p44
      %p46 = scmp.ne.s32.totalorder %s34, %s35
      %p47 = scmp.eq.s32.totalorder %s30, 1
      %p48 = por %p46, %p47
      %p50 = scmp.ne.s32.totalorder %s35, %s49
      %p51 = scmp.eq.s32.totalorder %s30, 0
      %p52 = por %p50, %p51
      %s54 = sadd.s32 %s53, 1
      %p57 = scmp.eq.s32.totalorder %s24, 1
      %p58 = scmp.ne.s32.totalorder %s53, %s55
      %p59 = scmp.eq.s32.totalorder %s24, 0
      %p60 = por %p58, %p59
      %p61 = scmp.ne.s32.totalorder %s53, %s55
      %p62 = scmp.eq.s32.totalorder %s29, 1
      %p63 = por %p61, %p62
      %p64 = scmp.ne.s32.totalorder %s55, %s56
      %p65 = scmp.eq.s32.totalorder %s29, 0
      %p66 = por %p64, %p65
      %p67 = scmp.ne.s32.totalorder %s55, %s56
      %p68 = scmp.eq.s32.totalorder %s30, 1
      %p69 = por %p67, %p68
      %p71 = scmp.ne.s32.totalorder %s56, %s70
      %p72 = scmp.eq.s32.totalorder %s30, 0
      %p73 = por %p71, %p72
      %s75 = sadd.s32 %s74, 1
      %p78 = scmp.eq.s32.totalorder %s24, 1
      %p79 = scmp.ne.s32.totalorder %s74, %s76
      %p80 = scmp.eq.s32.totalorder %s24, 0
      %p81 = por %p79, %p80
      %p82 = scmp.ne.s32.totalorder %s74, %s76
      %p83 = scmp.eq.s32.totalorder %s29, 1
      %p84 = por %p82, %p83
      %p85 = scmp.ne.s32.totalorder %s76, %s77
      %p86 = scmp.eq.s32.totalorder %s29, 0
      %p87 = por %p85, %p86
      %p88 = scmp.ne.s32.totalorder %s76, %s77
      %p89 = scmp.eq.s32.totalorder %s30, 1
      %p90 = por %p88, %p89
      %p92 = scmp.ne.s32.totalorder %s77, %s91
      %p93 = scmp.eq.s32.totalorder %s30, 0
      %p94 = por %p92, %p93
      %s96 = sadd.s32 %s95, 1
      %p99 = scmp.eq.s32.totalorder %s24, 1
      %p100 = scmp.ne.s32.totalorder %s95, %s97
      %p101 = scmp.eq.s32.totalorder %s24, 0
      %p102 = por %p100, %p101
      %p103 = scmp.ne.s32.totalorder %s95, %s97
      %p104 = scmp.eq.s32.totalorder %s29, 1
      %p105 = por %p103, %p104
      %p106 = scmp.ne.s32.totalorder %s97, %s98
      %p107 = scmp.eq.s32.totalorder %s29, 0
      %p108 = por %p106, %p107
      %p109 = scmp.ne.s32.totalorder %s97, %s98
      %p110 = scmp.eq.s32.totalorder %s30, 1
      %p111 = por %p109, %p110
      %p113 = scmp.ne.s32.totalorder %s98, %s112
      %p114 = scmp.eq.s32.totalorder %s30, 0
      %p115 = por %p113, %p114
      %s116 = ssub.s32 %s24, %s31
      %p117 = scmp.eq.s32.totalorder %s116, 0
      %s119 = sadd.s32 %s118, 1
      %s120 = scalar_select %p117, %s118, %s119
      %p123 = pneg %p117
      %p124 = scmp.eq.s32.totalorder %s24, 1
      %p125 = por %p123, %p124
      %p126 = scmp.ne.s32.totalorder %s118, %s121
      %p127 = scmp.eq.s32.totalorder %s24, 0
      %p128 = por %p126, %p127
      %p129 = scmp.ne.s32.totalorder %s118, %s121
      %p130 = scmp.eq.s32.totalorder %s29, 1
      %p131 = por %p129, %p130
      %p132 = scmp.ne.s32.totalorder %s121, %s122
      %p133 = scmp.eq.s32.totalorder %s29, 0
      %p134 = por %p132, %p133
      %p135 = scmp.ne.s32.totalorder %s121, %s122
      %p136 = scmp.eq.s32.totalorder %s30, 1
      %p137 = por %p135, %p136
      %p139 = scmp.ne.s32.totalorder %s122, %s138
      %p140 = scmp.eq.s32.totalorder %s30, 0
      %p141 = por %p139, %p140
      %s142 = ssub.s32 %s24, %s31
      %p143 = scmp.eq.s32.totalorder %s142, 0
      %s145 = sadd.s32 %s144, 1
      %s146 = scalar_select %p143, %s144, %s145
      %p149 = pneg %p143
      %p150 = scmp.eq.s32.totalorder %s24, 1
      %p151 = por %p149, %p150
      %p152 = scmp.ne.s32.totalorder %s144, %s147
      %p153 = scmp.eq.s32.totalorder %s24, 0
      %p154 = por %p152, %p153
      %p155 = scmp.ne.s32.totalorder %s144, %s147
      %p156 = scmp.eq.s32.totalorder %s29, 1
      %p157 = por %p155, %p156
      %p158 = scmp.ne.s32.totalorder %s147, %s148
      %p159 = scmp.eq.s32.totalorder %s29, 0
      %p160 = por %p158, %p159
      %p161 = scmp.ne.s32.totalorder %s147, %s148
      %p162 = scmp.eq.s32.totalorder %s30, 1
      %p163 = por %p161, %p162
      %p165 = scmp.ne.s32.totalorder %s148, %s164
      %p166 = scmp.eq.s32.totalorder %s30, 0
      %p167 = por %p165, %p166
      %s168 = ssub.s32 %s24, %s31
      %p169 = scmp.eq.s32.totalorder %s168, 0
      %s171 = sadd.s32 %s170, 1
      %s172 = scalar_select %p169, %s170, %s171
      %p175 = pneg %p169
      %p176 = scmp.eq.s32.totalorder %s24, 1
      %p177 = por %p175, %p176
      %p178 = scmp.ne.s32.totalorder %s170, %s173
      %p179 = scmp.eq.s32.totalorder %s24, 0
      %p180 = por %p178, %p179
      %p181 = scmp.ne.s32.totalorder %s170, %s173
      %p182 = scmp.eq.s32.totalorder %s29, 1
      %p183 = por %p181, %p182
      %p184 = scmp.ne.s32.totalorder %s173, %s174
      %p185 = scmp.eq.s32.totalorder %s29, 0
      %p186 = por %p184, %p185
      %p187 = scmp.ne.s32.totalorder %s173, %s174
      %p188 = scmp.eq.s32.totalorder %s30, 1
      %p189 = por %p187, %p188
      %p191 = scmp.ne.s32.totalorder %s174, %s190
      %p192 = scmp.eq.s32.totalorder %s30, 0
      %p193 = por %p191, %p192
      %s194 = ssub.s32 %s24, %s31
      %p195 = scmp.eq.s32.totalorder %s194, 0
      %s197 = sadd.s32 %s196, 1
      %s198 = scalar_select %p195, %s196, %s197
      %p201 = pneg %p195
      %p202 = scmp.eq.s32.totalorder %s24, 1
      %p203 = por %p201, %p202
      %p204 = scmp.ne.s32.totalorder %s196, %s199
      %p205 = scmp.eq.s32.totalorder %s24, 0
      %p206 = por %p204, %p205
      %p207 = scmp.ne.s32.totalorder %s196, %s199
      %p208 = scmp.eq.s32.totalorder %s29, 1
      %p209 = por %p207, %p208
      %p210 = scmp.ne.s32.totalorder %s199, %s200
      %p211 = scmp.eq.s32.totalorder %s29, 0
      %p212 = por %p210, %p211
      %p213 = scmp.ne.s32.totalorder %s199, %s200
      %p214 = scmp.eq.s32.totalorder %s30, 1
      %p215 = por %p213, %p214
      %p217 = scmp.ne.s32.totalorder %s200, %s216
      %p218 = scmp.eq.s32.totalorder %s30, 0
      %p219 = por %p217, %p218
      %s220 = ssub.s32 %s24, %s31
      %p221 = scmp.eq.s32.totalorder %s220, 0
      %s223 = sadd.s32 %s222, 1
      %s224 = scalar_select %p221, %s222, %s223
      %p227 = pneg %p221
      %p228 = scmp.eq.s32.totalorder %s24, 1
      %p229 = por %p227, %p228
      %p230 = scmp.ne.s32.totalorder %s222, %s225
      %p231 = scmp.eq.s32.totalorder %s24, 0
      %p232 = por %p230, %p231
      %p233 = scmp.ne.s32.totalorder %s222, %s225
      %p234 = scmp.eq.s32.totalorder %s29, 1
      %p235 = por %p233, %p234
      %p236 = scmp.ne.s32.totalorder %s225, %s226
      %p237 = scmp.eq.s32.totalorder %s29, 0
      %p238 = por %p236, %p237
      %p239 = scmp.ne.s32.totalorder %s225, %s226
      %p240 = scmp.eq.s32.totalorder %s30, 1
      %p241 = por %p239, %p240
      %p243 = scmp.ne.s32.totalorder %s226, %s242
      %p244 = scmp.eq.s32.totalorder %s30, 0
      %p245 = por %p243, %p244
      %p246 = scmp.le.s32.totalorder 1, %s24
      %p247 = scmp.lt.s32.totalorder %s24, 3
      %p248 = pnand %p246, %p247
      %p249 = pneg %p248
      // Predicated region
      $region9: #{additive_attention.1} parent=5 // pred_check
        _
      $region10: #{additive_attention.1} parent=5 // pred_check_branch
        %251 = sbr.rel (%p248) target = $region12
      $region11: #{additive_attention.1} parent=5 // pred_region
        %s252 = ssub.s32 %s24, 1
        // Predicated region
        $region13: #{additive_attention.1} parent=11 // pred_check
          %p253 = pneg %p45
        $region14: #{additive_attention.1} parent=11 // pred_check_branch
          %255 = sbr.rel (%p253) target = $region16
        $region15: #{additive_attention.1} parent=11 // pred_region
          %257 = vsyncadd [#allocation3], 0
          %s258 = sshll.u32 %s0, 4
          %s259 = int_to_ptr.hbm [resolvable:$true] %s258
          %s260 = sshll.u32 [#allocation2], 4
          %s261 = int_to_ptr.vmem [resolvable:$true] %s260
          %266 = dma.hbm_to_vmem [thread:$0]  %s259, 512, %s261, [#allocation3], 128, 128, 8
        $region16: #{additive_attention.1} parent=11 // pred_fallthru
          _
        // Predicated region
        $region17: #{additive_attention.1} parent=11 // pred_check
          %p267 = pneg %p66
        $region18: #{additive_attention.1} parent=11 // pred_check_branch
          %269 = sbr.rel (%p267) target = $region20
        $region19: #{additive_attention.1} parent=11 // pred_region
          %271 = vsyncadd [#allocation6], 0
          %s272 = sshll.u32 %s1, 4
          %s273 = int_to_ptr.hbm [resolvable:$true] %s272
          %s274 = sshll.u32 [#allocation5], 4
          %s275 = int_to_ptr.vmem [resolvable:$true] %s274
          %280 = dma.hbm_to_vmem [thread:$0]  %s273, 512, %s275, [#allocation6], 128, 128, 8
        $region20: #{additive_attention.1} parent=11 // pred_fallthru
          _
        // Predicated region
        $region21: #{additive_attention.1} parent=11 // pred_check
          %p281 = pneg %p87
        $region22: #{additive_attention.1} parent=11 // pred_check_branch
          %283 = sbr.rel (%p281) target = $region24
        $region23: #{additive_attention.1} parent=11 // pred_region
          %285 = vsyncadd [#allocation6], 0
          %s287 = sshll.u32 %s2, 4
          %s288 = int_to_ptr.hbm [resolvable:$true] %s287
          %s289 = sshll.u32 [#allocation7], 4
          %s290 = int_to_ptr.vmem [resolvable:$true] %s289
          %292 = dma.hbm_to_vmem [thread:$0]  %s288, 16, %s290, [#allocation6]
        $region24: #{additive_attention.1} parent=11 // pred_fallthru
          _
        // Predicated region
        $region25: #{additive_attention.1} parent=11 // pred_check
          %p293 = pneg %p108
        $region26: #{additive_attention.1} parent=11 // pred_check_branch
          %295 = sbr.rel (%p293) target = $region28
        $region27: #{additive_attention.1} parent=11 // pred_region
          %297 = vsyncadd [#allocation9], 0
          %s299 = sshll.u32 %s3, 4
          %s300 = int_to_ptr.hbm [resolvable:$true] %s299
          %s301 = sshll.u32 [#allocation8], 4
          %s302 = int_to_ptr.vmem [resolvable:$true] %s301
          %304 = dma.hbm_to_vmem [thread:$0]  %s300, 16, %s302, [#allocation9]
        $region28: #{additive_attention.1} parent=11 // pred_fallthru
          _
      $region12: #{additive_attention.1} parent=5 // pred_fallthru
        _
      %p305 = scmp.lt.s32.totalorder %s24, 2
      // Predicated region
      $region29: #{additive_attention.1} parent=5 // pred_check
        %p306 = pneg %p305
      $region30: #{additive_attention.1} parent=5 // pred_check_branch
        %308 = sbr.rel (%p306) target = $region32
      $region31: #{additive_attention.1} parent=5 // pred_region
        // Predicated region
        $region33: #{additive_attention.1} parent=31 // pred_check
          %p309 = pneg %p128
        $region34: #{additive_attention.1} parent=31 // pred_check_branch
          %311 = sbr.rel (%p309) target = $region36
        $region35: #{additive_attention.1} parent=31 // pred_region
          %s312 = sand.u32 %s24, 1
          %s313 = scalar_lea.sflag [#allocation3], %s312
          %s314 = sand.u32 %s118, 1
          %s315 = smul.addr %s314, 8
          %s316 = scalar_lea.vmem [#allocation10], %s315
          %318 = vsyncadd %s313, 0
          %s319 = smul.addr %s24, 8
          %s320 = scalar_lea.hbm %s4, %s319
          %s322 = sshll.u32 %s320, 4
          %s323 = int_to_ptr.hbm [resolvable:$true] %s322
          %s324 = sshll.u32 %s316, 4
          %s325 = int_to_ptr.vmem [resolvable:$true] %s324
          %327 = dma.hbm_to_vmem [thread:$0]  %s323, 128, %s325, %s313
        $region36: #{additive_attention.1} parent=31 // pred_fallthru
          _
        // Predicated region
        $region37: #{additive_attention.1} parent=31 // pred_check
          %p328 = pneg %p154
        $region38: #{additive_attention.1} parent=31 // pred_check_branch
          %330 = sbr.rel (%p328) target = $region40
        $region39: #{additive_attention.1} parent=31 // pred_region
          %s331 = sand.u32 %s24, 1
          %s332 = scalar_lea.sflag [#allocation3], %s331
          %s333 = sand.u32 %s144, 1
          %s334 = smul.addr %s333, 8
          %s335 = scalar_lea.vmem [#allocation11], %s334
          %337 = vsyncadd %s332, 0
          %s338 = smul.addr %s24, 8
          %s339 = scalar_lea.hbm %s5, %s338
          %s341 = sshll.u32 %s339, 4
          %s342 = int_to_ptr.hbm [resolvable:$true] %s341
          %s343 = sshll.u32 %s335, 4
          %s344 = int_to_ptr.vmem [resolvable:$true] %s343
          %346 = dma.hbm_to_vmem [thread:$0]  %s342, 128, %s344, %s332
        $region40: #{additive_attention.1} parent=31 // pred_fallthru
          _
        // Predicated region
        $region41: #{additive_attention.1} parent=31 // pred_check
          %p347 = pneg %p180
        $region42: #{additive_attention.1} parent=31 // pred_check_branch
          %349 = sbr.rel (%p347) target = $region44
        $region43: #{additive_attention.1} parent=31 // pred_region
          %s350 = sand.u32 %s24, 1
          %s351 = scalar_lea.sflag [#allocation3], %s350
          %s352 = sand.u32 %s170, 1
          %s353 = smul.addr %s352, 8
          %s354 = scalar_lea.vmem [#allocation12], %s353
          %356 = vsyncadd %s351, 0
          %s357 = smul.addr %s24, 8
          %s358 = scalar_lea.hbm %s6, %s357
          %s360 = sshll.u32 %s358, 4
          %s361 = int_to_ptr.hbm [resolvable:$true] %s360
          %s362 = sshll.u32 %s354, 4
          %s363 = int_to_ptr.vmem [resolvable:$true] %s362
          %365 = dma.hbm_to_vmem [thread:$0]  %s361, 128, %s363, %s351
        $region44: #{additive_attention.1} parent=31 // pred_fallthru
          _
      $region32: #{additive_attention.1} parent=5 // pred_fallthru
        _
      %p366 = scmp.le.s32.totalorder 1, %s24
      %p367 = scmp.lt.s32.totalorder %s24, 3
      %p368 = pnand %p366, %p367
      %p369 = pneg %p368
      // Predicated region
      $region45: #{additive_attention.1} parent=5 // pred_check
        _
      $region46: #{additive_attention.1} parent=5 // pred_check_branch
        %371 = sbr.rel (%p368) target = $region48
      $region47: #{additive_attention.1} parent=5 // pred_region
        %s372 = ssub.s32 %s24, 1
        // Predicated region
        $region49: #{additive_attention.1} parent=47 // pred_check
          %p373 = pneg %p45
        $region50: #{additive_attention.1} parent=47 // pred_check_branch
          %375 = sbr.rel (%p373) target = $region52
        $region51: #{additive_attention.1} parent=47 // pred_region
          %377 = dma.done [#allocation3], 512
        $region52: #{additive_attention.1} parent=47 // pred_fallthru
          _
        // Predicated region
        $region53: #{additive_attention.1} parent=47 // pred_check
          %p378 = pneg %p66
        $region54: #{additive_attention.1} parent=47 // pred_check_branch
          %380 = sbr.rel (%p378) target = $region56
        $region55: #{additive_attention.1} parent=47 // pred_region
          %382 = dma.done [#allocation6], 512
        $region56: #{additive_attention.1} parent=47 // pred_fallthru
          _
        // Predicated region
        $region57: #{additive_attention.1} parent=47 // pred_check
          %p383 = pneg %p87
        $region58: #{additive_attention.1} parent=47 // pred_check_branch
          %385 = sbr.rel (%p383) target = $region60
        $region59: #{additive_attention.1} parent=47 // pred_region
          %387 = dma.done [#allocation6], 16
        $region60: #{additive_attention.1} parent=47 // pred_fallthru
          _
        // Predicated region
        $region61: #{additive_attention.1} parent=47 // pred_check
          %p388 = pneg %p108
        $region62: #{additive_attention.1} parent=47 // pred_check_branch
          %390 = sbr.rel (%p388) target = $region64
        $region63: #{additive_attention.1} parent=47 // pred_region
          %392 = dma.done [#allocation9], 16
        $region64: #{additive_attention.1} parent=47 // pred_fallthru
          _
        %s393 = sand.u32 %s29, 1
        %s394 = scalar_lea.sflag [#allocation3], %s393
        %s395 = sand.u32 %s121, 1
        %s396 = smul.addr %s395, 8
        %s397 = scalar_lea.vmem [#allocation10], %s396
        // Predicated region
        $region65: #{additive_attention.1} parent=47 // pred_check
          %p398 = pneg %p134
        $region66: #{additive_attention.1} parent=47 // pred_check_branch
          %400 = sbr.rel (%p398) target = $region68
        $region67: #{additive_attention.1} parent=47 // pred_region
          %402 = dma.done %s394, 128
        $region68: #{additive_attention.1} parent=47 // pred_fallthru
          _
        %s403 = sand.u32 %s29, 1
        %s404 = scalar_lea.sflag [#allocation3], %s403
        %s405 = sand.u32 %s147, 1
        %s406 = smul.addr %s405, 8
        %s407 = scalar_lea.vmem [#allocation11], %s406
        // Predicated region
        $region69: #{additive_attention.1} parent=47 // pred_check
          %p408 = pneg %p160
        $region70: #{additive_attention.1} parent=47 // pred_check_branch
          %410 = sbr.rel (%p408) target = $region72
        $region71: #{additive_attention.1} parent=47 // pred_region
          %412 = dma.done %s404, 128
        $region72: #{additive_attention.1} parent=47 // pred_fallthru
          _
        %s413 = sand.u32 %s29, 1
        %s414 = scalar_lea.sflag [#allocation3], %s413
        %s415 = sand.u32 %s173, 1
        %s416 = smul.addr %s415, 8
        %s417 = scalar_lea.vmem [#allocation12], %s416
        // Predicated region
        $region73: #{additive_attention.1} parent=47 // pred_check
          %p418 = pneg %p186
        $region74: #{additive_attention.1} parent=47 // pred_check_branch
          %420 = sbr.rel (%p418) target = $region76
        $region75: #{additive_attention.1} parent=47 // pred_region
          %422 = dma.done %s414, 128
        $region76: #{additive_attention.1} parent=47 // pred_fallthru
          _
        %p423 = pneg %p45
        %p424 = pneg %p42
        %p425 = pneg %p66
        %p426 = pneg %p63
        %p427 = pneg %p87
        %p428 = pneg %p84
        %p429 = pneg %p108
        %p430 = pneg %p105
        %s431 = sand.u32 %s29, 1
        %s432 = scalar_lea.sflag [#allocation3], %s431
        %s433 = sand.u32 %s121, 1
        %s434 = smul.addr %s433, 8
        %s435 = scalar_lea.vmem [#allocation10], %s434
        %p436 = pneg %p134
        %p437 = pneg %p131
        %s438 = sand.u32 %s29, 1
        %s439 = scalar_lea.sflag [#allocation3], %s438
        %s440 = sand.u32 %s147, 1
        %s441 = smul.addr %s440, 8
        %s442 = scalar_lea.vmem [#allocation11], %s441
        %p443 = pneg %p160
        %p444 = pneg %p157
        %s445 = sand.u32 %s29, 1
        %s446 = scalar_lea.sflag [#allocation3], %s445
        %s447 = sand.u32 %s173, 1
        %s448 = smul.addr %s447, 8
        %s449 = scalar_lea.vmem [#allocation12], %s448
        %p450 = pneg %p186
        %p451 = pneg %p183
        %p452 = pneg %p212
        %p453 = pneg %p209
        %s454 = sand.u32 %s199, 1
        %s455 = scalar_lea.sflag [#allocation4], %s454
        %s456 = sand.u32 %s199, 1
        %s457 = scalar_lea.vmem [#allocation13], %s456
        %p458 = pneg %p238
        %p459 = pneg %p235
        %s460 = sand.u32 %s225, 1
        %s461 = scalar_lea.sflag [#allocation15], %s460
        %s462 = sand.u32 %s225, 1
        %s463 = scalar_lea.vmem [#allocation14], %s462
        %v464 = vld [vmem:[%s397] sm:$0xff]
        %v465 = vld [vmem:[%s407] sm:$0xff]
        %v466 = vld [vmem:[#allocation5] sm:$0xff]
        %v467 = vld [vmem:[#allocation5 + $0x8] sm:$0xff]
        %v468 = vld [vmem:[#allocation5 + $0x10] sm:$0xff]
        %v469 = vld [vmem:[#allocation5 + $0x18] sm:$0xff]
        %v470 = vld [vmem:[#allocation2] sm:$0xff]
        %v471 = vld [vmem:[#allocation2 + $0x8] sm:$0xff]
        %v472 = vld [vmem:[#allocation2 + $0x10] sm:$0xff]
        %v473 = vld [vmem:[#allocation2 + $0x18] sm:$0xff]
        %vm474 = vcmask 261120
        %v476 = vsel %vm474, %v464, 0
        %478 = vmatpush.msra.mxu0 0.0
        %479 = vmatpush.msra.mxu0 0.0
        %480 = vmatpush.msra.mxu0 0.0
        %481 = vmatpush.msra.mxu0 0.0
        %482 = vmatpush.msra.mxu0 0.0
        %483 = vmatpush.msra.mxu0 0.0
        %484 = vmatpush.msra.mxu0 0.0
        %485 = vmatpush.msra.mxu0 0.0
        %486 = vmatpush.msra.mxu0 0.0
        %487 = vmatpush.msra.mxu0 0.0
        %488 = vmatpush.msra.mxu0 0.0
        %489 = vmatpush.msra.mxu0 0.0
        %490 = vmatpush.msra.mxu0 %v473
        %491 = vmatpush.msra.mxu0 %v472
        %492 = vmatpush.msra.mxu0 %v471
        %493 = vmatpush.msra.mxu0 %v470
        %494 = vmatmul.f32.gmra.mxu0 %v476
        %v495 = vpop.f32.mrf.mxu0
        %v496 = vadd.f32 0.0, %v495
        %497 = vdwg.mxu0
        %v499 = vsel %vm474, %v465, 0
        %501 = vmatpush.msra.mxu0 0.0
        %502 = vmatpush.msra.mxu0 0.0
        %503 = vmatpush.msra.mxu0 0.0
        %504 = vmatpush.msra.mxu0 0.0
        %505 = vmatpush.msra.mxu0 0.0
        %506 = vmatpush.msra.mxu0 0.0
        %507 = vmatpush.msra.mxu0 0.0
        %508 = vmatpush.msra.mxu0 0.0
        %509 = vmatpush.msra.mxu0 0.0
        %510 = vmatpush.msra.mxu0 0.0
        %511 = vmatpush.msra.mxu0 0.0
        %512 = vmatpush.msra.mxu0 0.0
        %513 = vmatpush.msra.mxu0 %v469
        %514 = vmatpush.msra.mxu0 %v468
        %515 = vmatpush.msra.mxu0 %v467
        %516 = vmatpush.msra.mxu0 %v466
        %517 = vmatmul.f32.gmra.mxu0 %v499
        %v518 = vpop.f32.mrf.mxu0
        %v519 = vadd.f32 %v496, %v518
        %520 = vdwg.mxu0
        %v521 = vld [vmem:[#allocation7] sm:$0x1]
        %v523 = vperm.slane %v521, 0
        %v525 = vadd.f32 %v519, %v523
        %v526 = vtanh.pop %v525
        %v527 = vld [vmem:[#allocation8] sm:$0x1]
        %v529 = vperm.slane %v527, 0
        %v531 = vmul.f32 %v526, %v529
        %v532 = vsel %vm474, %v531, 0.0
        %533 = vadd.xlane.f32.xlu0 %v532
        %v534 = vpop.xlane.xlu0 %533
        %535 = vxpose.xlu0.b32.start [1/16] %v534, 128
        %536 = vxpose.xlu0.b32.cont [2/16] 0.0, 128
        %537 = vxpose.xlu0.b32.cont [3/16] 0.0, 128
        %538 = vxpose.xlu0.b32.cont [4/16] 0.0, 128
        %539 = vxpose.xlu0.b32.cont [5/16] 0.0, 128
        %540 = vxpose.xlu0.b32.cont [6/16] 0.0, 128
        %541 = vxpose.xlu0.b32.cont [7/16] 0.0, 128
        %542 = vxpose.xlu0.b32.cont [8/16] 0.0, 128
        %543 = vxpose.xlu0.b32.cont [9/16] 0.0, 128
        %544 = vxpose.xlu0.b32.cont [10/16] 0.0, 128
        %545 = vxpose.xlu0.b32.cont [11/16] 0.0, 128
        %546 = vxpose.xlu0.b32.cont [12/16] 0.0, 128
        %547 = vxpose.xlu0.b32.cont [13/16] 0.0, 128
        %548 = vxpose.xlu0.b32.cont [14/16] 0.0, 128
        %549 = vxpose.xlu0.b32.cont [15/16] 0.0, 128
        %550 = vxpose.xlu0.b32.end [16/16] 0.0, 128
        %v551 = vpop.trf.xlu0
        %v552 = vpop.trf.xlu0
        %v553 = vpop.trf.xlu0
        %v554 = vpop.trf.xlu0
        %v555 = vpop.trf.xlu0
        %v556 = vpop.trf.xlu0
        %v557 = vpop.trf.xlu0
        %v558 = vpop.trf.xlu0
        %v559 = vpop.trf.xlu0
        %v560 = vpop.trf.xlu0
        %v561 = vpop.trf.xlu0
        %v562 = vpop.trf.xlu0
        %v563 = vpop.trf.xlu0
        %v564 = vpop.trf.xlu0
        %v565 = vpop.trf.xlu0
        %v566 = vpop.trf.xlu0
        %vm567 = vcmask 57344
        %v568 = vsel %vm567, %v551, -inf
        %569 = vmax.xlane.f32.xlu0 %v568
        %v570 = vpop.xlane.xlu0 %569
        %v571 = vsub.f32 %v551, %v570
        %v572 = vmul.f32 %v571, 1.442695
        %v573 = vpow.pop %v572
        %v574 = vsel %vm567, %v573, 0.0
        %575 = vadd.xlane.f32.xlu0 %v574
        %v576 = vpop.xlane.xlu0 %575
        %v577 = vrcp.pop %v576
        %v578 = vmul.f32 %v576, %v577
        %v579 = vsub.f32 1.0, %v578
        %v580 = vmul.f32 %v577, %v579
        %v581 = vadd.f32 %v577, %v580
        %vm582 = vweird.f32 %v576
        %vm583 = vweird.f32 %v577
        %vm584 = vmor %vm582, %vm583
        %v585 = vsel %vm584, %v577, %v581
        %v586 = vand.u32 2147483647, %v576
        %vm587 = vcmp.eq.f32.partialorder %v586, 8.507059e+37
        %v588 = vand.u32 %v576, 2147483648
        %v589 = vor.u32 1.1754944e-38, %v588
        %v590 = vsel %vm587, %v589, %v585
        %v591 = vmul.f32 %v573, %v590
        %592 = vst.msk [vmem:[%s463] sm:$0x1] %vm567, %v591
        %v593 = vld [vmem:[%s417] sm:$0xff]
        %vm594 = vcmask 64512
        %v596 = vsel %vm594, %v591, 0
        %598 = vmatpush.msra.mxu0 0.0
        %599 = vmatpush.msra.mxu0 0.0
        %600 = vmatpush.msra.mxu0 0.0
        %601 = vmatpush.msra.mxu0 0.0
        %602 = vmatpush.msra.mxu0 0.0
        %603 = vmatpush.msra.mxu0 0.0
        %604 = vmatpush.msra.mxu0 0.0
        %605 = vmatpush.msra.mxu0 0.0
        %606 = vmatpush.msra.mxu0 0.0
        %607 = vmatpush.msra.mxu0 0.0
        %608 = vmatpush.msra.mxu0 0.0
        %609 = vmatpush.msra.mxu0 0.0
        %610 = vmatpush.msra.mxu0 0.0
        %611 = vmatpush.msra.mxu0 0.0
        %612 = vmatpush.msra.mxu0 0.0
        %613 = vmatpush.msra.mxu0 %v593
        %614 = vmatmul.f32.gmra.mxu0 %v596
        %v615 = vpop.f32.mrf.mxu0
        %v616 = vadd.f32 0.0, %v615
        %617 = vdwg.mxu0
        %vm618 = vcmask 253952
        %619 = vst.msk [vmem:[%s457] sm:$0x1] %vm618, %v616
        %s620 = sand.u32 %s199, 1
        %s621 = scalar_lea.sflag [#allocation4], %s620
        %s622 = sand.u32 %s199, 1
        %s623 = scalar_lea.vmem [#allocation13], %s622
        %s624 = sand.u32 %s225, 1
        %s625 = scalar_lea.sflag [#allocation15], %s624
        %s626 = sand.u32 %s225, 1
        %s627 = scalar_lea.vmem [#allocation14], %s626
        // Predicated region
        $region77: #{additive_attention.1} parent=47 // pred_check
          %p628 = pneg %p209
        $region78: #{additive_attention.1} parent=47 // pred_check_branch
          %630 = sbr.rel (%p628) target = $region80
        $region79: #{additive_attention.1} parent=47 // pred_region
          %632 = vsyncadd %s621, 0
          %s633 = scalar_lea.hbm %s7, %s29
          %s635 = sshll.u32 %s623, 4
          %s636 = int_to_ptr.vmem [resolvable:$true] %s635
          %s637 = sshll.u32 %s633, 4
          %s638 = int_to_ptr.hbm [resolvable:$true] %s637
          %640 = dma.vmem_to_hbm [thread:$0]  %s636, 16, %s638, %s621
        $region80: #{additive_attention.1} parent=47 // pred_fallthru
          _
        // Predicated region
        $region81: #{additive_attention.1} parent=47 // pred_check
          %p641 = pneg %p235
        $region82: #{additive_attention.1} parent=47 // pred_check_branch
          %643 = sbr.rel (%p641) target = $region84
        $region83: #{additive_attention.1} parent=47 // pred_region
          %645 = vsyncadd %s625, 0
          %s646 = scalar_lea.hbm %s8, %s29
          %s648 = sshll.u32 %s627, 4
          %s649 = int_to_ptr.vmem [resolvable:$true] %s648
          %s650 = sshll.u32 %s646, 4
          %s651 = int_to_ptr.hbm [resolvable:$true] %s650
          %653 = dma.vmem_to_hbm [thread:$0]  %s649, 16, %s651, %s625
        $region84: #{additive_attention.1} parent=47 // pred_fallthru
          _
      $region48: #{additive_attention.1} parent=5 // pred_fallthru
        _
      %p654 = scmp.le.s32.totalorder 2, %s24
      // Predicated region
      $region85: #{additive_attention.1} parent=5 // pred_check
        %p655 = pneg %p654
      $region86: #{additive_attention.1} parent=5 // pred_check_branch
        %657 = sbr.rel (%p655) target = $region88
      $region87: #{additive_attention.1} parent=5 // pred_region
        %s658 = ssub.s32 %s24, 2
        // Predicated region
        $region89: #{additive_attention.1} parent=87 // pred_check
          %p659 = pneg %p215
        $region90: #{additive_attention.1} parent=87 // pred_check_branch
          %661 = sbr.rel (%p659) target = $region92
        $region91: #{additive_attention.1} parent=87 // pred_region
          %s662 = sand.u32 %s200, 1
          %s663 = scalar_lea.sflag [#allocation4], %s662
          %s664 = sand.u32 %s200, 1
          %s665 = scalar_lea.vmem [#allocation13], %s664
          %667 = dma.done %s663, 16
        $region92: #{additive_attention.1} parent=87 // pred_fallthru
          _
        // Predicated region
        $region93: #{additive_attention.1} parent=87 // pred_check
          %p668 = pneg %p241
        $region94: #{additive_attention.1} parent=87 // pred_check_branch
          %670 = sbr.rel (%p668) target = $region96
        $region95: #{additive_attention.1} parent=87 // pred_region
          %s671 = sand.u32 %s226, 1
          %s672 = scalar_lea.sflag [#allocation15], %s671
          %s673 = sand.u32 %s226, 1
          %s674 = scalar_lea.vmem [#allocation14], %s673
          %676 = dma.done %s672, 16
        $region96: #{additive_attention.1} parent=87 // pred_fallthru
          _
      $region88: #{additive_attention.1} parent=5 // pred_fallthru
        _
    $region6: #{additive_attention.1} parent=1 // loop_footer
      %s28 = sadd.s32 1, %s24
    $region7: #{additive_attention.1} parent=1 // loop_footer_branch
      %23 = sbr.rel target = $region3
    $region8: #{additive_attention.1} parent=1 // loop_exit
      _
    %677 = vsyncpa [#allocation3], 1
    %s678 = scalar_lea.sflag [#allocation3], 1
    %679 = vsyncpa %s678, 1
    %680 = vsyncpa [#allocation6], 1
    %681 = vsyncpa [#allocation9], 1
    %682 = vsyncpa [#allocation4], 1
    %s683 = scalar_lea.sflag [#allocation4], 1
    %684 = vsyncpa %s683, 1
    %685 = vsyncpa [#allocation15], 1
    %s686 = scalar_lea.sflag [#allocation15], 1
    %687 = vsyncpa %s686, 1

// kernel: additive_attention.1
$region0: #{additive_attention.1}
  #allocation0 [shape = 'u32[]', space=smem, size = 0x4, offset = 0x4, fixed_abs, tag = 'smem constant byte address 0x4 - core index']
  #allocation1 [shape = 'u32[72,128]{1,0:T(1,128)}', space=vmem, size = 0x9000, scoped, tag = 'internal scratch']
  %s0 = inlined_call_operand.hbm [shape: f32[32,32], index: 0, kind: input, shape index: {}]
  %s1 = inlined_call_operand.hbm [shape: f32[32,32], index: 1, kind: input, shape index: {}]
  %s2 = inlined_call_operand.hbm [shape: f32[1,32], index: 2, kind: input, shape index: {}]
  %s3 = inlined_call_operand.hbm [shape: f32[1,32], index: 3, kind: input, shape index: {}]
  %s4 = inlined_call_operand.hbm [shape: f32[2,8,32], index: 4, kind: input, shape index: {}]
  %s5 = inlined_call_operand.hbm [shape: f32[2,8,32], index: 5, kind: input, shape index: {}]
  %s6 = inlined_call_operand.hbm [shape: f32[2,8,32], index: 6, kind: input, shape index: {}]
  %s7 = inlined_call_operand.hbm [shape: f32[2,1,32], index: 7, kind: output, shape index: {0}]
  %s8 = inlined_call_operand.hbm [shape: f32[2,1,8], index: 8, kind: output, shape index: {1}]
  %9 = xla_tuple %s7, %s8
  %s10 = sld [smem:[#allocation0]]
  $region97: #{additive_attention.1} parent=0
    _
  %s12 = ssub.s32 1, %s10
  %s13 = scalar_select 0, %s12, %s10
  $region1: #{additive_attention.1} parent=0
    #allocation2 [shape = 'u8[16384]{0}', space=vmem, size = 0x4000, scoped, tag = 'input window, operand 0, single buffered']
    #allocation3 [shape = 's32[2]{0}', space=sflag, size = 0x8, scoped, tag = 'scoped memory for additive_attention.1']
    #allocation4 [shape = 's32[2]{0}', space=sflag, size = 0x8, scoped, tag = 'scoped memory for additive_attention.1']
    #allocation5 [shape = 'u8[16384]{0}', space=vmem, size = 0x4000, scoped, tag = 'input window, operand 1, single buffered']
    #allocation6 [shape = 's32[1]{0}', space=sflag, size = 0x4, scoped, tag = 'scoped memory for additive_attention.1']
    #allocation7 [shape = 'u8[512]{0}', space=vmem, size = 0x400, scoped, tag = 'input window, operand 2, single buffered']
    #allocation8 [shape = 'u8[512]{0}', space=vmem, size = 0x400, scoped, tag = 'input window, operand 3, single buffered']
    #allocation9 [shape = 's32[1]{0}', space=sflag, size = 0x4, scoped, tag = 'scoped memory for additive_attention.1']
    #allocation10 [shape = 'u8[8192]{0}', space=vmem, size = 0x2000, scoped, tag = 'input window, operand 4']
    #allocation11 [shape = 'u8[8192]{0}', space=vmem, size = 0x2000, scoped, tag = 'input window, operand 5']
    #allocation12 [shape = 'u8[8192]{0}', space=vmem, size = 0x2000, scoped, tag = 'input window, operand 6']
    #allocation13 [shape = 'u8[1024]{0}', space=vmem, size = 0x400, scoped, tag = 'output window, operand 0']
    #allocation14 [shape = 'u8[1024]{0}', space=vmem, size = 0x400, scoped, tag = 'output window, operand 1']
    #allocation15 [shape = 's32[2]{0}', space=sflag, size = 0x8, scoped, tag = 'scoped memory for additive_attention.1']
    %14 = vsyncpa [#allocation3], 0
    %15 = vsyncpa [#allocation6], 0
    %16 = vsyncpa [#allocation9], 0
    %17 = vsyncpa [#allocation4], 0
    %s18 = scalar_lea.sflag [#allocation4], 1
    %19 = vsyncpa %s18, 0
    %20 = vsyncpa [#allocation15], 0
    %s21 = scalar_lea.sflag [#allocation15], 1
    %22 = vsyncpa %s21, 0
    loop: start=0, step=1, limit=4
    $region2: #{additive_attention.1} parent=1 // loop_pre_header
      _
    $region3: #{additive_attention.1} parent=1 // loop_header
      %s24 = sphi 0, %s28
      %p25 = scmp.ge.s32.totalorder %s24, 4
      %s32 = sphi 0, %s32
      %s34 = sphi 0, %s32
      %s35 = sphi 0, %s34
      %s49 = sphi 0, %s35
      %s53 = sphi 0, %s53
      %s55 = sphi 0, %s53
      %s56 = sphi 0, %s55
      %s70 = sphi 0, %s56
      %s74 = sphi 0, %s74
      %s76 = sphi 0, %s74
      %s77 = sphi 0, %s76
      %s91 = sphi 0, %s77
      %s95 = sphi 0, %s95
      %s97 = sphi 0, %s95
      %s98 = sphi 0, %s97
      %s112 = sphi 0, %s98
      %s118 = sphi 0, %s120
      %s121 = sphi 0, %s118
      %s122 = sphi 0, %s121
      %s138 = sphi 0, %s122
      %s144 = sphi 0, %s146
      %s147 = sphi 0, %s144
      %s148 = sphi 0, %s147
      %s164 = sphi 0, %s148
      %s170 = sphi 0, %s172
      %s173 = sphi 0, %s170
      %s174 = sphi 0, %s173
      %s190 = sphi 0, %s174
      %s196 = sphi 0, %s198
      %s199 = sphi 0, %s196
      %s200 = sphi 0, %s199
      %s216 = sphi 0, %s200
      %s222 = sphi 0, %s224
      %s225 = sphi 0, %s222
      %s226 = sphi 0, %s225
      %s242 = sphi 0, %s226
    $region4: #{additive_attention.1} parent=1 // loop_header_branch
      %27 = sbr.rel (%p25) target = $region8
    $region5: #{additive_attention.1} parent=1 // loop_body
      %s29 = ssub.s32 %s24, 1
      %s30 = ssub.s32 %s24, 2
      %s31 = sadd.s32 %s24, 1
      %s33 = sadd.s32 %s32, 1
      %p36 = scmp.eq.s32.totalorder %s24, 1
      %p37 = scmp.ne.s32.totalorder %s32, %s34
      %p38 = scmp.eq.s32.totalorder %s24, 0
      %p39 = por %p37, %p38
      %p40 = scmp.ne.s32.totalorder %s32, %s34
      %p41 = scmp.eq.s32.totalorder %s29, 1
      %p42 = por %p40, %p41
      %p43 = scmp.ne.s32.totalorder %s34, %s35
      %p44 = scmp.eq.s32.totalorder %s29, 0
      %p45 = por %p43, %p44
      %p46 = scmp.ne.s32.totalorder %s34, %s35
      %p47 = scmp.eq.s32.totalorder %s30, 1
      %p48 = por %p46, %p47
      %p50 = scmp.ne.s32.totalorder %s35, %s49
      %p51 = scmp.eq.s32.totalorder %s30, 0
      %p52 = por %p50, %p51
      %s54 = sadd.s32 %s53, 1
      %p57 = scmp.eq.s32.totalorder %s24, 1
      %p58 = scmp.ne.s32.totalorder %s53, %s55
      %p59 = scmp.eq.s32.totalorder %s24, 0
      %p60 = por %p58, %p59
      %p61 = scmp.ne.s32.totalorder %s53, %s55
      %p62 = scmp.eq.s32.totalorder %s29, 1
      %p63 = por %p61, %p62
      %p64 = scmp.ne.s32.totalorder %s55, %s56
      %p65 = scmp.eq.s32.totalorder %s29, 0
      %p66 = por %p64, %p65
      %p67 = scmp.ne.s32.totalorder %s55, %s56
      %p68 = scmp.eq.s32.totalorder %s30, 1
      %p69 = por %p67, %p68
      %p71 = scmp.ne.s32.totalorder %s56, %s70
      %p72 = scmp.eq.s32.totalorder %s30, 0
      %p73 = por %p71, %p72
      %s75 = sadd.s32 %s74, 1
      %p78 = scmp.eq.s32.totalorder %s24, 1
      %p79 = scmp.ne.s32.totalorder %s74, %s76
      %p80 = scmp.eq.s32.totalorder %s24, 0
      %p81 = por %p79, %p80
      %p82 = scmp.ne.s32.totalorder %s74, %s76
      %p83 = scmp.eq.s32.totalorder %s29, 1
      %p84 = por %p82, %p83
      %p85 = scmp.ne.s32.totalorder %s76, %s77
      %p86 = scmp.eq.s32.totalorder %s29, 0
      %p87 = por %p85, %p86
      %p88 = scmp.ne.s32.totalorder %s76, %s77
      %p89 = scmp.eq.s32.totalorder %s30, 1
      %p90 = por %p88, %p89
      %p92 = scmp.ne.s32.totalorder %s77, %s91
      %p93 = scmp.eq.s32.totalorder %s30, 0
      %p94 = por %p92, %p93
      %s96 = sadd.s32 %s95, 1
      %p99 = scmp.eq.s32.totalorder %s24, 1
      %p100 = scmp.ne.s32.totalorder %s95, %s97
      %p101 = scmp.eq.s32.totalorder %s24, 0
      %p102 = por %p100, %p101
      %p103 = scmp.ne.s32.totalorder %s95, %s97
      %p104 = scmp.eq.s32.totalorder %s29, 1
      %p105 = por %p103, %p104
      %p106 = scmp.ne.s32.totalorder %s97, %s98
      %p107 = scmp.eq.s32.totalorder %s29, 0
      %p108 = por %p106, %p107
      %p109 = scmp.ne.s32.totalorder %s97, %s98
      %p110 = scmp.eq.s32.totalorder %s30, 1
      %p111 = por %p109, %p110
      %p113 = scmp.ne.s32.totalorder %s98, %s112
      %p114 = scmp.eq.s32.totalorder %s30, 0
      %p115 = por %p113, %p114
      %s116 = ssub.s32 %s24, %s31
      %p117 = scmp.eq.s32.totalorder %s116, 0
      %s119 = sadd.s32 %s118, 1
      %s120 = scalar_select %p117, %s118, %s119
      %p123 = pneg %p117
      %p124 = scmp.eq.s32.totalorder %s24, 1
      %p125 = por %p123, %p124
      %p126 = scmp.ne.s32.totalorder %s118, %s121
      %p127 = scmp.eq.s32.totalorder %s24, 0
      %p128 = por %p126, %p127
      %p129 = scmp.ne.s32.totalorder %s118, %s121
      %p130 = scmp.eq.s32.totalorder %s29, 1
      %p131 = por %p129, %p130
      %p132 = scmp.ne.s32.totalorder %s121, %s122
      %p133 = scmp.eq.s32.totalorder %s29, 0
      %p134 = por %p132, %p133
      %p135 = scmp.ne.s32.totalorder %s121, %s122
      %p136 = scmp.eq.s32.totalorder %s30, 1
      %p137 = por %p135, %p136
      %p139 = scmp.ne.s32.totalorder %s122, %s138
      %p140 = scmp.eq.s32.totalorder %s30, 0
      %p141 = por %p139, %p140
      %s142 = ssub.s32 %s24, %s31
      %p143 = scmp.eq.s32.totalorder %s142, 0
      %s145 = sadd.s32 %s144, 1
      %s146 = scalar_select %p143, %s144, %s145
      %p149 = pneg %p143
      %p150 = scmp.eq.s32.totalorder %s24, 1
      %p151 = por %p149, %p150
      %p152 = scmp.ne.s32.totalorder %s144, %s147
      %p153 = scmp.eq.s32.totalorder %s24, 0
      %p154 = por %p152, %p153
      %p155 = scmp.ne.s32.totalorder %s144, %s147
      %p156 = scmp.eq.s32.totalorder %s29, 1
      %p157 = por %p155, %p156
      %p158 = scmp.ne.s32.totalorder %s147, %s148
      %p159 = scmp.eq.s32.totalorder %s29, 0
      %p160 = por %p158, %p159
      %p161 = scmp.ne.s32.totalorder %s147, %s148
      %p162 = scmp.eq.s32.totalorder %s30, 1
      %p163 = por %p161, %p162
      %p165 = scmp.ne.s32.totalorder %s148, %s164
      %p166 = scmp.eq.s32.totalorder %s30, 0
      %p167 = por %p165, %p166
      %s168 = ssub.s32 %s24, %s31
      %p169 = scmp.eq.s32.totalorder %s168, 0
      %s171 = sadd.s32 %s170, 1
      %s172 = scalar_select %p169, %s170, %s171
      %p175 = pneg %p169
      %p176 = scmp.eq.s32.totalorder %s24, 1
      %p177 = por %p175, %p176
      %p178 = scmp.ne.s32.totalorder %s170, %s173
      %p179 = scmp.eq.s32.totalorder %s24, 0
      %p180 = por %p178, %p179
      %p181 = scmp.ne.s32.totalorder %s170, %s173
      %p182 = scmp.eq.s32.totalorder %s29, 1
      %p183 = por %p181, %p182
      %p184 = scmp.ne.s32.totalorder %s173, %s174
      %p185 = scmp.eq.s32.totalorder %s29, 0
      %p186 = por %p184, %p185
      %p187 = scmp.ne.s32.totalorder %s173, %s174
      %p188 = scmp.eq.s32.totalorder %s30, 1
      %p189 = por %p187, %p188
      %p191 = scmp.ne.s32.totalorder %s174, %s190
      %p192 = scmp.eq.s32.totalorder %s30, 0
      %p193 = por %p191, %p192
      %s194 = ssub.s32 %s24, %s31
      %p195 = scmp.eq.s32.totalorder %s194, 0
      %s197 = sadd.s32 %s196, 1
      %s198 = scalar_select %p195, %s196, %s197
      %p201 = pneg %p195
      %p202 = scmp.eq.s32.totalorder %s24, 1
      %p203 = por %p201, %p202
      %p204 = scmp.ne.s32.totalorder %s196, %s199
      %p205 = scmp.eq.s32.totalorder %s24, 0
      %p206 = por %p204, %p205
      %p207 = scmp.ne.s32.totalorder %s196, %s199
      %p208 = scmp.eq.s32.totalorder %s29, 1
      %p209 = por %p207, %p208
      %p210 = scmp.ne.s32.totalorder %s199, %s200
      %p211 = scmp.eq.s32.totalorder %s29, 0
      %p212 = por %p210, %p211
      %p213 = scmp.ne.s32.totalorder %s199, %s200
      %p214 = scmp.eq.s32.totalorder %s30, 1
      %p215 = por %p213, %p214
      %p217 = scmp.ne.s32.totalorder %s200, %s216
      %p218 = scmp.eq.s32.totalorder %s30, 0
      %p219 = por %p217, %p218
      %s220 = ssub.s32 %s24, %s31
      %p221 = scmp.eq.s32.totalorder %s220, 0
      %s223 = sadd.s32 %s222, 1
      %s224 = scalar_select %p221, %s222, %s223
      %p227 = pneg %p221
      %p228 = scmp.eq.s32.totalorder %s24, 1
      %p229 = por %p227, %p228
      %p230 = scmp.ne.s32.totalorder %s222, %s225
      %p231 = scmp.eq.s32.totalorder %s24, 0
      %p232 = por %p230, %p231
      %p233 = scmp.ne.s32.totalorder %s222, %s225
      %p234 = scmp.eq.s32.totalorder %s29, 1
      %p235 = por %p233, %p234
      %p236 = scmp.ne.s32.totalorder %s225, %s226
      %p237 = scmp.eq.s32.totalorder %s29, 0
      %p238 = por %p236, %p237
      %p239 = scmp.ne.s32.totalorder %s225, %s226
      %p240 = scmp.eq.s32.totalorder %s30, 1
      %p241 = por %p239, %p240
      %p243 = scmp.ne.s32.totalorder %s226, %s242
      %p244 = scmp.eq.s32.totalorder %s30, 0
      %p245 = por %p243, %p244
      %p246 = scmp.le.s32.totalorder 1, %s24
      %p247 = scmp.lt.s32.totalorder %s24, 3
      %p248 = pnand %p246, %p247
      %p249 = pneg %p248
      // Predicated region
      $region9: #{additive_attention.1} parent=5 // pred_check
        _
      $region10: #{additive_attention.1} parent=5 // pred_check_branch
        %251 = sbr.rel (%p248) target = $region12
      $region11: #{additive_attention.1} parent=5 // pred_region
        %s252 = ssub.s32 %s24, 1
        // Predicated region
        $region13: #{additive_attention.1} parent=11 // pred_check
          %p253 = pneg %p45
        $region14: #{additive_attention.1} parent=11 // pred_check_branch
          %255 = sbr.rel (%p253) target = $region16
        $region15: #{additive_attention.1} parent=11 // pred_region
          %257 = vsyncadd [#allocation3], 0
          %s258 = sshll.u32 %s0, 4
          %s259 = int_to_ptr.hbm [resolvable:$true] %s258
          %s260 = sshll.u32 [#allocation2], 4
          %s261 = int_to_ptr.vmem [resolvable:$true] %s260
          %266 = dma.hbm_to_vmem [thread:$0]  %s259, 512, %s261, [#allocation3], 128, 128, 8
        $region16: #{additive_attention.1} parent=11 // pred_fallthru
          _
        // Predicated region
        $region17: #{additive_attention.1} parent=11 // pred_check
          %p267 = pneg %p66
        $region18: #{additive_attention.1} parent=11 // pred_check_branch
          %269 = sbr.rel (%p267) target = $region20
        $region19: #{additive_attention.1} parent=11 // pred_region
          %271 = vsyncadd [#allocation6], 0
          %s272 = sshll.u32 %s1, 4
          %s273 = int_to_ptr.hbm [resolvable:$true] %s272
          %s274 = sshll.u32 [#allocation5], 4
          %s275 = int_to_ptr.vmem [resolvable:$true] %s274
          %280 = dma.hbm_to_vmem [thread:$0]  %s273, 512, %s275, [#allocation6], 128, 128, 8
        $region20: #{additive_attention.1} parent=11 // pred_fallthru
          _
        // Predicated region
        $region21: #{additive_attention.1} parent=11 // pred_check
          %p281 = pneg %p87
        $region22: #{additive_attention.1} parent=11 // pred_check_branch
          %283 = sbr.rel (%p281) target = $region24
        $region23: #{additive_attention.1} parent=11 // pred_region
          %285 = vsyncadd [#allocation6], 0
          %s287 = sshll.u32 %s2, 4
          %s288 = int_to_ptr.hbm [resolvable:$true] %s287
          %s289 = sshll.u32 [#allocation7], 4
          %s290 = int_to_ptr.vmem [resolvable:$true] %s289
          %292 = dma.hbm_to_vmem [thread:$0]  %s288, 16, %s290, [#allocation6]
        $region24: #{additive_attention.1} parent=11 // pred_fallthru
          _
        // Predicated region
        $region25: #{additive_attention.1} parent=11 // pred_check
          %p293 = pneg %p108
        $region26: #{additive_attention.1} parent=11 // pred_check_branch
          %295 = sbr.rel (%p293) target = $region28
        $region27: #{additive_attention.1} parent=11 // pred_region
          %297 = vsyncadd [#allocation9], 0
          %s299 = sshll.u32 %s3, 4
          %s300 = int_to_ptr.hbm [resolvable:$true] %s299
          %s301 = sshll.u32 [#allocation8], 4
          %s302 = int_to_ptr.vmem [resolvable:$true] %s301
          %304 = dma.hbm_to_vmem [thread:$0]  %s300, 16, %s302, [#allocation9]
        $region28: #{additive_attention.1} parent=11 // pred_fallthru
          _
      $region12: #{additive_attention.1} parent=5 // pred_fallthru
        _
      %p305 = scmp.lt.s32.totalorder %s24, 2
      // Predicated region
      $region29: #{additive_attention.1} parent=5 // pred_check
        %p306 = pneg %p305
      $region30: #{additive_attention.1} parent=5 // pred_check_branch
        %308 = sbr.rel (%p306) target = $region32
      $region31: #{additive_attention.1} parent=5 // pred_region
        // Predicated region
        $region33: #{additive_attention.1} parent=31 // pred_check
          %p309 = pneg %p128
        $region34: #{additive_attention.1} parent=31 // pred_check_branch
          %311 = sbr.rel (%p309) target = $region36
        $region35: #{additive_attention.1} parent=31 // pred_region
          %s312 = sand.u32 %s24, 1
          %s313 = scalar_lea.sflag [#allocation3], %s312
          %s314 = sand.u32 %s118, 1
          %s315 = smul.addr %s314, 8
          %s316 = scalar_lea.vmem [#allocation10], %s315
          %318 = vsyncadd %s313, 0
          %s319 = smul.addr %s24, 8
          %s320 = scalar_lea.hbm %s4, %s319
          %s322 = sshll.u32 %s320, 4
          %s323 = int_to_ptr.hbm [resolvable:$true] %s322
          %s324 = sshll.u32 %s316, 4
          %s325 = int_to_ptr.vmem [resolvable:$true] %s324
          %327 = dma.hbm_to_vmem [thread:$0]  %s323, 128, %s325, %s313
        $region36: #{additive_attention.1} parent=31 // pred_fallthru
          _
        // Predicated region
        $region37: #{additive_attention.1} parent=31 // pred_check
          %p328 = pneg %p154
        $region38: #{additive_attention.1} parent=31 // pred_check_branch
          %330 = sbr.rel (%p328) target = $region40
        $region39: #{additive_attention.1} parent=31 // pred_region
          %s331 = sand.u32 %s24, 1
          %s332 = scalar_lea.sflag [#allocation3], %s331
          %s333 = sand.u32 %s144, 1
          %s334 = smul.addr %s333, 8
          %s335 = scalar_lea.vmem [#allocation11], %s334
          %337 = vsyncadd %s332, 0
          %s338 = smul.addr %s24, 8
          %s339 = scalar_lea.hbm %s5, %s338
          %s341 = sshll.u32 %s339, 4
          %s342 = int_to_ptr.hbm [resolvable:$true] %s341
          %s343 = sshll.u32 %s335, 4
          %s344 = int_to_ptr.vmem [resolvable:$true] %s343
          %346 = dma.hbm_to_vmem [thread:$0]  %s342, 128, %s344, %s332
        $region40: #{additive_attention.1} parent=31 // pred_fallthru
          _
        // Predicated region
        $region41: #{additive_attention.1} parent=31 // pred_check
          %p347 = pneg %p180
        $region42: #{additive_attention.1} parent=31 // pred_check_branch
          %349 = sbr.rel (%p347) target = $region44
        $region43: #{additive_attention.1} parent=31 // pred_region
          %s350 = sand.u32 %s24, 1
          %s351 = scalar_lea.sflag [#allocation3], %s350
          %s352 = sand.u32 %s170, 1
          %s353 = smul.addr %s352, 8
          %s354 = scalar_lea.vmem [#allocation12], %s353
          %356 = vsyncadd %s351, 0
          %s357 = smul.addr %s24, 8
          %s358 = scalar_lea.hbm %s6, %s357
          %s360 = sshll.u32 %s358, 4
          %s361 = int_to_ptr.hbm [resolvable:$true] %s360
          %s362 = sshll.u32 %s354, 4
          %s363 = int_to_ptr.vmem [resolvable:$true] %s362
          %365 = dma.hbm_to_vmem [thread:$0]  %s361, 128, %s363, %s351
        $region44: #{additive_attention.1} parent=31 // pred_fallthru
          _
      $region32: #{additive_attention.1} parent=5 // pred_fallthru
        _
      %p366 = scmp.le.s32.totalorder 1, %s24
      %p367 = scmp.lt.s32.totalorder %s24, 3
      %p368 = pnand %p366, %p367
      %p369 = pneg %p368
      // Predicated region
      $region45: #{additive_attention.1} parent=5 // pred_check
        _
      $region46: #{additive_attention.1} parent=5 // pred_check_branch
        %371 = sbr.rel (%p368) target = $region48
      $region47: #{additive_attention.1} parent=5 // pred_region
        %s372 = ssub.s32 %s24, 1
        // Predicated region
        $region49: #{additive_attention.1} parent=47 // pred_check
          %p373 = pneg %p45
        $region50: #{additive_attention.1} parent=47 // pred_check_branch
          %375 = sbr.rel (%p373) target = $region52
        $region51: #{additive_attention.1} parent=47 // pred_region
          %377 = dma.done [#allocation3], 512
        $region52: #{additive_attention.1} parent=47 // pred_fallthru
          _
        // Predicated region
        $region53: #{additive_attention.1} parent=47 // pred_check
          %p378 = pneg %p66
        $region54: #{additive_attention.1} parent=47 // pred_check_branch
          %380 = sbr.rel (%p378) target = $region56
        $region55: #{additive_attention.1} parent=47 // pred_region
          %382 = dma.done [#allocation6], 512
        $region56: #{additive_attention.1} parent=47 // pred_fallthru
          _
        // Predicated region
        $region57: #{additive_attention.1} parent=47 // pred_check
          %p383 = pneg %p87
        $region58: #{additive_attention.1} parent=47 // pred_check_branch
          %385 = sbr.rel (%p383) target = $region60
        $region59: #{additive_attention.1} parent=47 // pred_region
          %387 = dma.done [#allocation6], 16
        $region60: #{additive_attention.1} parent=47 // pred_fallthru
          _
        // Predicated region
        $region61: #{additive_attention.1} parent=47 // pred_check
          %p388 = pneg %p108
        $region62: #{additive_attention.1} parent=47 // pred_check_branch
          %390 = sbr.rel (%p388) target = $region64
        $region63: #{additive_attention.1} parent=47 // pred_region
          %392 = dma.done [#allocation9], 16
        $region64: #{additive_attention.1} parent=47 // pred_fallthru
          _
        %s393 = sand.u32 %s29, 1
        %s394 = scalar_lea.sflag [#allocation3], %s393
        %s395 = sand.u32 %s121, 1
        %s396 = smul.addr %s395, 8
        %s397 = scalar_lea.vmem [#allocation10], %s396
        // Predicated region
        $region65: #{additive_attention.1} parent=47 // pred_check
          %p398 = pneg %p134
        $region66: #{additive_attention.1} parent=47 // pred_check_branch
          %400 = sbr.rel (%p398) target = $region68
        $region67: #{additive_attention.1} parent=47 // pred_region
          %402 = dma.done %s394, 128
        $region68: #{additive_attention.1} parent=47 // pred_fallthru
          _
        %s403 = sand.u32 %s29, 1
        %s404 = scalar_lea.sflag [#allocation3], %s403
        %s405 = sand.u32 %s147, 1
        %s406 = smul.addr %s405, 8
        %s407 = scalar_lea.vmem [#allocation11], %s406
        // Predicated region
        $region69: #{additive_attention.1} parent=47 // pred_check
          %p408 = pneg %p160
        $region70: #{additive_attention.1} parent=47 // pred_check_branch
          %410 = sbr.rel (%p408) target = $region72
        $region71: #{additive_attention.1} parent=47 // pred_region
          %412 = dma.done %s404, 128
        $region72: #{additive_attention.1} parent=47 // pred_fallthru
          _
        %s413 = sand.u32 %s29, 1
        %s414 = scalar_lea.sflag [#allocation3], %s413
        %s415 = sand.u32 %s173, 1
        %s416 = smul.addr %s415, 8
        %s417 = scalar_lea.vmem [#allocation12], %s416
        // Predicated region
        $region73: #{additive_attention.1} parent=47 // pred_check
          %p418 = pneg %p186
        $region74: #{additive_attention.1} parent=47 // pred_check_branch
          %420 = sbr.rel (%p418) target = $region76
        $region75: #{additive_attention.1} parent=47 // pred_region
          %422 = dma.done %s414, 128
        $region76: #{additive_attention.1} parent=47 // pred_fallthru
          _
        %p423 = pneg %p45
        %p424 = pneg %p42
        %p425 = pneg %p66
        %p426 = pneg %p63
        %p427 = pneg %p87
        %p428 = pneg %p84
        %p429 = pneg %p108
        %p430 = pneg %p105
        %s431 = sand.u32 %s29, 1
        %s432 = scalar_lea.sflag [#allocation3], %s431
        %s433 = sand.u32 %s121, 1
        %s434 = smul.addr %s433, 8
        %s435 = scalar_lea.vmem [#allocation10], %s434
        %p436 = pneg %p134
        %p437 = pneg %p131
        %s438 = sand.u32 %s29, 1
        %s439 = scalar_lea.sflag [#allocation3], %s438
        %s440 = sand.u32 %s147, 1
        %s441 = smul.addr %s440, 8
        %s442 = scalar_lea.vmem [#allocation11], %s441
        %p443 = pneg %p160
        %p444 = pneg %p157
        %s445 = sand.u32 %s29, 1
        %s446 = scalar_lea.sflag [#allocation3], %s445
        %s447 = sand.u32 %s173, 1
        %s448 = smul.addr %s447, 8
        %s449 = scalar_lea.vmem [#allocation12], %s448
        %p450 = pneg %p186
        %p451 = pneg %p183
        %p452 = pneg %p212
        %p453 = pneg %p209
        %s454 = sand.u32 %s199, 1
        %s455 = scalar_lea.sflag [#allocation4], %s454
        %s456 = sand.u32 %s199, 1
        %s457 = scalar_lea.vmem [#allocation13], %s456
        %p458 = pneg %p238
        %p459 = pneg %p235
        %s460 = sand.u32 %s225, 1
        %s461 = scalar_lea.sflag [#allocation15], %s460
        %s462 = sand.u32 %s225, 1
        %s463 = scalar_lea.vmem [#allocation14], %s462
        %v464 = vld [vmem:[%s397] sm:$0xff]
        %v465 = vld [vmem:[%s407] sm:$0xff]
        %v466 = vld [vmem:[#allocation5] sm:$0xff]
        %v467 = vld [vmem:[#allocation5 + $0x8] sm:$0xff]
        %v468 = vld [vmem:[#allocation5 + $0x10] sm:$0xff]
        %v469 = vld [vmem:[#allocation5 + $0x18] sm:$0xff]
        %v470 = vld [vmem:[#allocation2] sm:$0xff]
        %v471 = vld [vmem:[#allocation2 + $0x8] sm:$0xff]
        %v472 = vld [vmem:[#allocation2 + $0x10] sm:$0xff]
        %v473 = vld [vmem:[#allocation2 + $0x18] sm:$0xff]
        %vm474 = vcmask 261120
        %v476 = vsel %vm474, %v464, 0
        %478 = vmatpush.msra.mxu0 0.0
        %479 = vmatpush.msra.mxu0 0.0
        %480 = vmatpush.msra.mxu0 0.0
        %481 = vmatpush.msra.mxu0 0.0
        %482 = vmatpush.msra.mxu0 0.0
        %483 = vmatpush.msra.mxu0 0.0
        %484 = vmatpush.msra.mxu0 0.0
        %485 = vmatpush.msra.mxu0 0.0
        %486 = vmatpush.msra.mxu0 0.0
        %487 = vmatpush.msra.mxu0 0.0
        %488 = vmatpush.msra.mxu0 0.0
        %489 = vmatpush.msra.mxu0 0.0
        %490 = vmatpush.msra.mxu0 %v473
        %491 = vmatpush.msra.mxu0 %v472
        %492 = vmatpush.msra.mxu0 %v471
        %493 = vmatpush.msra.mxu0 %v470
        %494 = vmatmul.f32.gmra.mxu0 %v476
        %v495 = vpop.f32.mrf.mxu0
        %v496 = vadd.f32 0.0, %v495
        %497 = vdwg.mxu0
        %v499 = vsel %vm474, %v465, 0
        %501 = vmatpush.msra.mxu0 0.0
        %502 = vmatpush.msra.mxu0 0.0
        %503 = vmatpush.msra.mxu0 0.0
        %504 = vmatpush.msra.mxu0 0.0
        %505 = vmatpush.msra.mxu0 0.0
        %506 = vmatpush.msra.mxu0 0.0
        %507 = vmatpush.msra.mxu0 0.0
        %508 = vmatpush.msra.mxu0 0.0
        %509 = vmatpush.msra.mxu0 0.0
        %510 = vmatpush.msra.mxu0 0.0
        %511 = vmatpush.msra.mxu0 0.0
        %512 = vmatpush.msra.mxu0 0.0
        %513 = vmatpush.msra.mxu0 %v469
        %514 = vmatpush.msra.mxu0 %v468
        %515 = vmatpush.msra.mxu0 %v467
        %516 = vmatpush.msra.mxu0 %v466
        %517 = vmatmul.f32.gmra.mxu0 %v499
        %v518 = vpop.f32.mrf.mxu0
        %v519 = vadd.f32 %v496, %v518
        %520 = vdwg.mxu0
        %v521 = vld [vmem:[#allocation7] sm:$0x1]
        %v523 = vperm.slane %v521, 0
        %v525 = vadd.f32 %v519, %v523
        %v526 = vtanh.pop %v525
        %v527 = vld [vmem:[#allocation8] sm:$0x1]
        %v529 = vperm.slane %v527, 0
        %v531 = vmul.f32 %v526, %v529
        %v532 = vsel %vm474, %v531, 0.0
        %533 = vadd.xlane.f32.xlu0 %v532
        %v534 = vpop.xlane.xlu0 %533
        %535 = vxpose.xlu0.b32.start [1/16] %v534, 128
        %536 = vxpose.xlu0.b32.cont [2/16] 0.0, 128
        %537 = vxpose.xlu0.b32.cont [3/16] 0.0, 128
        %538 = vxpose.xlu0.b32.cont [4/16] 0.0, 128
        %539 = vxpose.xlu0.b32.cont [5/16] 0.0, 128
        %540 = vxpose.xlu0.b32.cont [6/16] 0.0, 128
        %541 = vxpose.xlu0.b32.cont [7/16] 0.0, 128
        %542 = vxpose.xlu0.b32.cont [8/16] 0.0, 128
        %543 = vxpose.xlu0.b32.cont [9/16] 0.0, 128
        %544 = vxpose.xlu0.b32.cont [10/16] 0.0, 128
        %545 = vxpose.xlu0.b32.cont [11/16] 0.0, 128
        %546 = vxpose.xlu0.b32.cont [12/16] 0.0, 128
        %547 = vxpose.xlu0.b32.cont [13/16] 0.0, 128
        %548 = vxpose.xlu0.b32.cont [14/16] 0.0, 128
        %549 = vxpose.xlu0.b32.cont [15/16] 0.0, 128
        %550 = vxpose.xlu0.b32.end [16/16] 0.0, 128
        %v551 = vpop.trf.xlu0
        %v552 = vpop.trf.xlu0
        %v553 = vpop.trf.xlu0
        %v554 = vpop.trf.xlu0
        %v555 = vpop.trf.xlu0
        %v556 = vpop.trf.xlu0
        %v557 = vpop.trf.xlu0
        %v558 = vpop.trf.xlu0
        %v559 = vpop.trf.xlu0
        %v560 = vpop.trf.xlu0
        %v561 = vpop.trf.xlu0
        %v562 = vpop.trf.xlu0
        %v563 = vpop.trf.xlu0
        %v564 = vpop.trf.xlu0
        %v565 = vpop.trf.xlu0
        %v566 = vpop.trf.xlu0
        %vm567 = vcmask 57344
        %v568 = vsel %vm567, %v551, -inf
        %569 = vmax.xlane.f32.xlu0 %v568
        %v570 = vpop.xlane.xlu0 %569
        %v571 = vsub.f32 %v551, %v570
        %v572 = vmul.f32 %v571, 1.442695
        %v573 = vpow.pop %v572
        %v574 = vsel %vm567, %v573, 0.0
        %575 = vadd.xlane.f32.xlu0 %v574
        %v576 = vpop.xlane.xlu0 %575
        %v577 = vrcp.pop %v576
        %v578 = vmul.f32 %v576, %v577
        %v579 = vsub.f32 1.0, %v578
        %v580 = vmul.f32 %v577, %v579
        %v581 = vadd.f32 %v577, %v580
        %vm582 = vweird.f32 %v576
        %vm583 = vweird.f32 %v577
        %vm584 = vmor %vm582, %vm583
        %v585 = vsel %vm584, %v577, %v581
        %v586 = vand.u32 2147483647, %v576
        %vm587 = vcmp.eq.f32.partialorder %v586, 8.507059e+37
        %v588 = vand.u32 %v576, 2147483648
        %v589 = vor.u32 1.1754944e-38, %v588
        %v590 = vsel %vm587, %v589, %v585
        %v591 = vmul.f32 %v573, %v590
        %592 = vst.msk [vmem:[%s463] sm:$0x1] %vm567, %v591
        %v593 = vld [vmem:[%s417] sm:$0xff]
        %vm594 = vcmask 64512
        %v596 = vsel %vm594, %v591, 0
        %598 = vmatpush.msra.mxu0 0.0
        %599 = vmatpush.msra.mxu0 0.0
        %600 = vmatpush.msra.mxu0 0.0
        %601 = vmatpush.msra.mxu0 0.0
        %602 = vmatpush.msra.mxu0 0.0
        %603 = vmatpush.msra.mxu0 0.0
        %604 = vmatpush.msra.mxu0 0.0
        %605 = vmatpush.msra.mxu0 0.0
        %606 = vmatpush.msra.mxu0 0.0
        %607 = vmatpush.msra.mxu0 0.0
        %608 = vmatpush.msra.mxu0 0.0
        %609 = vmatpush.msra.mxu0 0.0
        %610 = vmatpush.msra.mxu0 0.0
        %611 = vmatpush.msra.mxu0 0.0
        %612 = vmatpush.msra.mxu0 0.0
        %613 = vmatpush.msra.mxu0 %v593
        %614 = vmatmul.f32.gmra.mxu0 %v596
        %v615 = vpop.f32.mrf.mxu0
        %v616 = vadd.f32 0.0, %v615
        %617 = vdwg.mxu0
        %vm618 = vcmask 253952
        %619 = vst.msk [vmem:[%s457] sm:$0x1] %vm618, %v616
        %s620 = sand.u32 %s199, 1
        %s621 = scalar_lea.sflag [#allocation4], %s620
        %s622 = sand.u32 %s199, 1
        %s623 = scalar_lea.vmem [#allocation13], %s622
        %s624 = sand.u32 %s225, 1
        %s625 = scalar_lea.sflag [#allocation15], %s624
        %s626 = sand.u32 %s225, 1
        %s627 = scalar_lea.vmem [#allocation14], %s626
        // Predicated region
        $region77: #{additive_attention.1} parent=47 // pred_check
          %p628 = pneg %p209
        $region78: #{additive_attention.1} parent=47 // pred_check_branch
          %630 = sbr.rel (%p628) target = $region80
        $region79: #{additive_attention.1} parent=47 // pred_region
          %632 = vsyncadd %s621, 0
          %s633 = scalar_lea.hbm %s7, %s29
          %s635 = sshll.u32 %s623, 4
          %s636 = int_to_ptr.vmem [resolvable:$true] %s635
          %s637 = sshll.u32 %s633, 4
          %s638 = int_to_ptr.hbm [resolvable:$true] %s637
          %640 = dma.vmem_to_hbm [thread:$0]  %s636, 16, %s638, %s621
        $region80: #{additive_attention.1} parent=47 // pred_fallthru
          _
        // Predicated region
        $region81: #{additive_attention.1} parent=47 // pred_check
          %p641 = pneg %p235
        $region82: #{additive_attention.1} parent=47 // pred_check_branch
          %643 = sbr.rel (%p641) target = $region84
        $region83: #{additive_attention.1} parent=47 // pred_region
          %645 = vsyncadd %s625, 0
          %s646 = scalar_lea.hbm %s8, %s29
          %s648 = sshll.u32 %s627, 4
          %s649 = int_to_ptr.vmem [resolvable:$true] %s648
          %s650 = sshll.u32 %s646, 4
          %s651 = int_to_ptr.hbm [resolvable:$true] %s650
          %653 = dma.vmem_to_hbm [thread:$0]  %s649, 16, %s651, %s625
        $region84: #{additive_attention.1} parent=47 // pred_fallthru
          _
      $region48: #{additive_attention.1} parent=5 // pred_fallthru
        _
      %p654 = scmp.le.s32.totalorder 2, %s24
      // Predicated region
      $region85: #{additive_attention.1} parent=5 // pred_check
        %p655 = pneg %p654
      $region86: #{additive_attention.1} parent=5 // pred_check_branch
        %657 = sbr.rel (%p655) target = $region88
      $region87: #{additive_attention.1} parent=5 // pred_region
        %s658 = ssub.s32 %s24, 2
        // Predicated region
        $region89: #{additive_attention.1} parent=87 // pred_check
          %p659 = pneg %p215
        $region90: #{additive_attention.1} parent=87 // pred_check_branch
          %661 = sbr.rel (%p659) target = $region92
        $region91: #{additive_attention.1} parent=87 // pred_region
          %s662 = sand.u32 %s200, 1
          %s663 = scalar_lea.sflag [#allocation4], %s662
          %s664 = sand.u32 %s200, 1
          %s665 = scalar_lea.vmem [#allocation13], %s664
          %667 = dma.done %s663, 16
        $region92: #{additive_attention.1} parent=87 // pred_fallthru
          _
        // Predicated region
        $region93: #{additive_attention.1} parent=87 // pred_check
          %p668 = pneg %p241
        $region94: #{additive_attention.1} parent=87 // pred_check_branch
          %670 = sbr.rel (%p668) target = $region96
        $region95: #{additive_attention.1} parent=87 // pred_region
          %s671 = sand.u32 %s226, 1
          %s672 = scalar_lea.sflag [#allocation15], %s671
          %s673 = sand.u32 %s226, 1
          %s674 = scalar_lea.vmem [#allocation14], %s673
          %676 = dma.done %s672, 16
        $region96: #{additive_attention.1} parent=87 // pred_fallthru
          _
      $region88: #{additive_attention.1} parent=5 // pred_fallthru
        _
    $region6: #{additive_attention.1} parent=1 // loop_footer
      %s28 = sadd.s32 1, %s24
    $region7: #{additive_attention.1} parent=1 // loop_footer_branch
      %23 = sbr.rel target = $region3
    $region8: #{additive_attention.1} parent=1 // loop_exit
      _
    %677 = vsyncpa [#allocation3], 1
    %s678 = scalar_lea.sflag [#allocation3], 1
    %679 = vsyncpa %s678, 1
    %680 = vsyncpa [#allocation6], 1
    %681 = vsyncpa [#allocation9], 1
    %682 = vsyncpa [#allocation4], 1
    %s683 = scalar_lea.sflag [#allocation4], 1
    %684 = vsyncpa %s683, 1
    %685 = vsyncpa [#allocation15], 1
    %s686 = scalar_lea.sflag [#allocation15], 1
    %687 = vsyncpa %s686, 1

</llo_original>
